<compile_context>
chip_gen: v7x
topology: tpu7x:2x2x1
jax: 0.10.0
libtpu: 0.0.40
codegen_flags: <defaults>
</compile_context>

<pallas_src>
import jax
import jax.numpy as jnp
from jax.experimental import pallas as pl
from jax.experimental.pallas import tpu as pltpu

HIDDEN = 768
CLS_HIDDEN = 20
NUM_CLASSES = 2
PAD_N = 128          # lane-dense padded width for the classification head
ROW_ALIGN = 16       # bf16 sublane packing: 16 rows per (16,128) tile


def _cdiv(a, b):
    return (a + b - 1) // b


def _round_up(x, m):
    return _cdiv(x, m) * m


# ----------------------------------------------------------------------------
# Pallas kernel: fusion gate + gated blend + lane-padded classification head
# ----------------------------------------------------------------------------
def fusion_cls_kernel(wg_ref, x_ref, y_ref, w1_ref, b1_ref, w2_ref, b2_ref,
                      logits_ref, *rep_ref):
    # Activations are streamed in bf16; upcast once and do all math in f32
    # (v5e VPU/EUP have no bf16, and the blend feeds MXU matmuls anyway).
    x = x_ref[...].astype(jnp.float32)            # [TM, 768] representationX
    y = y_ref[...].astype(jnp.float32)            # [TM, 768] representationY

    # F = sigmoid(Ws*X + Wh*X) == sigmoid((Ws+Wh)*X); Wg folded in the wrapper.
    gate = jax.nn.sigmoid(wg_ref[...] * x)

    # representation = F*X + (1-F)*Y  ==  Y + F*(X - Y)
    rep = y + gate * (x - y)
    if rep_ref:
        rep_ref[0][...] = rep.astype(rep_ref[0].dtype)

    # classification head (Dropout is identity in eval mode):
    # Linear(768,20) -> ReLU -> Linear(20,2), padded to 128 output lanes.
    h = jnp.dot(rep, w1_ref[...], preferred_element_type=jnp.float32) + b1_ref[...]
    h = jnp.maximum(h, 0.0)
    logits_ref[...] = (
        jnp.dot(h, w2_ref[...], preferred_element_type=jnp.float32) + b2_ref[...]
    )


def fusion_bert_head(rep_x, rep_y, ws, wh, w1, b1, w2, b2, *,
                     tm=1024,
                     activation_dtype=jnp.bfloat16,
                     return_representation=True,
                     rep_dtype=jnp.float32):
    """Fused gate + classification head.

    rep_x, rep_y : [B, 768]
    ws, wh       : [1, 768]
    w1 : [768, 20], b1 : [1, 20], w2 : [20, 2], b2 : [1, 2]
    returns (output [B, 2], representation [B, 768]) or just output.
    """
    B = rep_x.shape[0]
    f32 = jnp.float32

    # Parameter fold (constant per model; the spec multiplies X by both Ws, Wh).
    wg = (ws + wh).astype(f32)

    # Zero-pad the head to lane-dense 128-wide tiles (no masked partial stores).
    w1p = jnp.zeros((HIDDEN, PAD_N), f32).at[:, :CLS_HIDDEN].set(w1.astype(f32))
    b1p = jnp.zeros((1, PAD_N), f32).at[:, :CLS_HIDDEN].set(b1.astype(f32))
    w2p = jnp.zeros((PAD_N, PAD_N), f32).at[:CLS_HIDDEN, :NUM_CLASSES].set(w2.astype(f32))
    b2p = jnp.zeros((1, PAD_N), f32).at[:, :NUM_CLASSES].set(b2.astype(f32))

    # Batch tiling.  Pad only to the 16-row sublane boundary (fused with the
    # bf16 cast), pick a tile that yields >= 2 grid steps whenever B allows it
    # (v7x megacore), and let Pallas mask the partial last tile.
    b_rows = _round_up(B, ROW_ALIGN)
    tm = max(ROW_ALIGN, min(tm, _round_up(_cdiv(B, 2), ROW_ALIGN)))
    grid = (_cdiv(b_rows, tm),)

    def prep(a):
        a = a.astype(activation_dtype)
        if b_rows != B:
            a = jnp.pad(a, ((0, b_rows - B), (0, 0)))
        return a

    xs = prep(rep_x)
    ys = prep(rep_y)

    act_bytes = jnp.dtype(activation_dtype).itemsize
    rep_bytes = jnp.dtype(rep_dtype).itemsize if return_representation else 0
    flops_per_row = 2 * HIDDEN * PAD_N + 2 * PAD_N * PAD_N + 4 * HIDDEN + 3 * PAD_N
    cost = pl.CostEstimate(
        flops=b_rows * flops_per_row,
        transcendentals=b_rows * HIDDEN,
        bytes_accessed=(2 * b_rows * HIDDEN * act_bytes
                        + b_rows * PAD_N * 4
                        + b_rows * HIDDEN * rep_bytes
                        + (HIDDEN + HIDDEN * PAD_N + PAD_N * PAD_N + 2 * PAD_N) * 4),
    )

    out_shape = [jax.ShapeDtypeStruct((b_rows, PAD_N), f32)]
    out_specs = [pl.BlockSpec((tm, PAD_N), lambda i: (i, 0))]
    if return_representation:
        out_shape.append(jax.ShapeDtypeStruct((b_rows, HIDDEN), rep_dtype))
        out_specs.append(pl.BlockSpec((tm, HIDDEN), lambda i: (i, 0)))

    def build(single_buffer_weights):
        def const_spec(shape):
            if single_buffer_weights:
                # Constant block index -> keep weights VMEM-resident with a
                # single buffer instead of the default double buffer.
                return pl.BlockSpec(shape, lambda i: (0, 0),
                                    pipeline_mode=pl.Buffered(1))
            return pl.BlockSpec(shape, lambda i: (0, 0))

        def row_spec(shape):
            return pl.BlockSpec(shape, lambda i: (i, 0))

        return pl.pallas_call(
            fusion_cls_kernel,
            out_shape=tuple(out_shape),
            grid=grid,
            in_specs=[
                const_spec((1, HIDDEN)),        # wg
                row_spec((tm, HIDDEN)),         # rep_x (bf16 stream)
                row_spec((tm, HIDDEN)),         # rep_y (bf16 stream)
                const_spec((HIDDEN, PAD_N)),    # w1 (padded)
                const_spec((1, PAD_N)),         # b1 (padded)
                const_spec((PAD_N, PAD_N)),     # w2 (padded)
                const_spec((1, PAD_N)),         # b2 (padded)
            ],
            out_specs=tuple(out_specs),
            compiler_params=pltpu.CompilerParams(
                dimension_semantics=("parallel",),
                vmem_limit_bytes=28 * 1024 * 1024,
            ),
            cost_estimate=cost,
        )

    args = (wg, xs, ys, w1p, b1p, w2p, b2p)
    try:
        outs = build(True)(*args)
    except Exception:
        # Fallback if this jax version rejects pipeline_mode=pl.Buffered(1).
        outs = build(False)(*args)

    logits = outs[0][:B, :NUM_CLASSES]
    if return_representation:
        return logits, outs[1][:B]
    return logits


# ----------------------------------------------------------------------------
# Synthetic stand-in for DNAbert.BERT (plain-JAX glue)
# ----------------------------------------------------------------------------
def synthetic_bert(seqs, emb, pooler_w, pooler_b):
    # embedding lookup + mean pool over sequence + tanh pooler  -> [B, 768]
    tok = emb[seqs]                      # [B, S, 768]
    pooled = tok.mean(axis=1)            # [B, 768]
    return jnp.tanh(pooled @ pooler_w + pooler_b)


def fusion_bert_forward(seqs, params):
    rep_x = synthetic_bert(seqs, params["emb1"], params["pool1_w"], params["pool1_b"])
    rep_y = synthetic_bert(seqs, params["emb2"], params["pool2_w"], params["pool2_b"])
    return fusion_bert_head(
        rep_x, rep_y,
        params["Ws"], params["Wh"],
        params["cls_w1"], params["cls_b1"],
        params["cls_w2"], params["cls_b2"],
    )


# ----------------------------------------------------------------------------
# Pure-JAX reference for the kernelized part (sanity check)
# ----------------------------------------------------------------------------
def head_ref(rep_x, rep_y, ws, wh, w1, b1, w2, b2):
    gate = jax.nn.sigmoid(ws * rep_x + wh * rep_x)
    rep = gate * rep_x + (1.0 - gate) * rep_y
    h = jnp.maximum(rep @ w1 + b1, 0.0)
    return h @ w2 + b2, rep


if __name__ == "__main__":
    key = jax.random.PRNGKey(0)
    ks = jax.random.split(key, 12)

    # B not a multiple of 16: exercises the sublane pad.  B > 16: exercises the
    # 2-tile batch grid (the megacore "parallel" path on v7x).
    B, S, VOCAB = 24, 8, 16

    params = {
        # stand-in BERT params
        "emb1": jax.random.normal(ks[0], (VOCAB, HIDDEN), jnp.float32) * 0.02,
        "emb2": jax.random.normal(ks[1], (VOCAB, HIDDEN), jnp.float32) * 0.02,
        "pool1_w": jax.random.normal(ks[2], (HIDDEN, HIDDEN), jnp.float32) * 0.02,
        "pool1_b": jnp.zeros((HIDDEN,), jnp.float32),
        "pool2_w": jax.random.normal(ks[3], (HIDDEN, HIDDEN), jnp.float32) * 0.02,
        "pool2_b": jnp.zeros((HIDDEN,), jnp.float32),
        # FusionBERT params (self.Ws / self.Wh ~ torch.randn(1, 768))
        "Ws": jax.random.normal(ks[4], (1, HIDDEN), jnp.float32),
        "Wh": jax.random.normal(ks[5], (1, HIDDEN), jnp.float32),
        # classification head: Linear(768, 20) then Linear(20, 2)
        "cls_w1": jax.random.normal(ks[6], (HIDDEN, CLS_HIDDEN), jnp.float32) * 0.02,
        "cls_b1": jax.random.normal(ks[7], (1, CLS_HIDDEN), jnp.float32) * 0.02,
        "cls_w2": jax.random.normal(ks[8], (CLS_HIDDEN, NUM_CLASSES), jnp.float32) * 0.02,
        "cls_b2": jax.random.normal(ks[9], (1, NUM_CLASSES), jnp.float32) * 0.02,
    }

    seqs = jax.random.randint(ks[10], (B, S), 0, VOCAB, dtype=jnp.int32)

    output, representation = jax.block_until_ready(fusion_bert_forward(seqs, params))
    assert output.shape == (B, NUM_CLASSES)
    assert representation.shape == (B, HIDDEN)

    # numerical sanity check of the Pallas hot path vs a pure-JAX reference
    # that sees the same bf16-rounded activations the kernel streams.
    rx = synthetic_bert(seqs, params["emb1"], params["pool1_w"], params["pool1_b"])
    ry = synthetic_bert(seqs, params["emb2"], params["pool2_w"], params["pool2_b"])
    rxq = rx.astype(jnp.bfloat16).astype(jnp.float32)
    ryq = ry.astype(jnp.bfloat16).astype(jnp.float32)
    ref_out, ref_rep = head_ref(rxq, ryq, params["Ws"], params["Wh"],
                                params["cls_w1"], params["cls_b1"],
                                params["cls_w2"], params["cls_b2"])
    assert jnp.allclose(output, ref_out, atol=5e-3, rtol=5e-3)
    assert jnp.allclose(representation, ref_rep, atol=5e-3, rtol=5e-3)

    # logits-only path (skips the representation writeback entirely).
    logits_only = jax.block_until_ready(fusion_bert_head(
        rx, ry, params["Ws"], params["Wh"],
        params["cls_w1"], params["cls_b1"],
        params["cls_w2"], params["cls_b2"],
        return_representation=False))
    assert logits_only.shape == (B, NUM_CLASSES)
    assert jnp.allclose(logits_only, output, atol=1e-4, rtol=1e-4)

    print("KERNEL_OK")
</pallas_src>

<mosaic_0001>
module attributes {stable_mosaic.version = 11 : i64} {
  func.func @fusion_cls_kernel(%arg0: i32, %arg1: memref<1x768xf32, #tpu.memory_space<vmem>>, %arg2: memref<16x768xbf16, #tpu.memory_space<vmem>>, %arg3: memref<16x768xbf16, #tpu.memory_space<vmem>>, %arg4: memref<768x128xf32, #tpu.memory_space<vmem>>, %arg5: memref<1x128xf32, #tpu.memory_space<vmem>>, %arg6: memref<128x128xf32, #tpu.memory_space<vmem>>, %arg7: memref<1x128xf32, #tpu.memory_space<vmem>>, %arg8: memref<16x128xf32, #tpu.memory_space<vmem>>, %arg9: memref<16x768xf32, #tpu.memory_space<vmem>>) attributes {dimension_semantics = [#tpu.dimension_semantics<parallel>], iteration_bounds = array<i64: 2>, scalar_prefetch = 0 : i64, scratch_operands = 0 : i64, tpu.core_type = #tpu.core_type<tc>, window_params = [{pipeline_mode = #tpu.pipeline_mode<synchronous>, transform_indices = @transform_0, window_bounds = array<i64: 1, 768>}, {transform_indices = @transform_1, window_bounds = array<i64: 16, 768>}, {transform_indices = @transform_2, window_bounds = array<i64: 16, 768>}, {pipeline_mode = #tpu.pipeline_mode<synchronous>, transform_indices = @transform_3, window_bounds = array<i64: 768, 128>}, {pipeline_mode = #tpu.pipeline_mode<synchronous>, transform_indices = @transform_4, window_bounds = array<i64: 1, 128>}, {pipeline_mode = #tpu.pipeline_mode<synchronous>, transform_indices = @transform_5, window_bounds = array<i64: 128, 128>}, {pipeline_mode = #tpu.pipeline_mode<synchronous>, transform_indices = @transform_6, window_bounds = array<i64: 1, 128>}, {transform_indices = @transform_7, window_bounds = array<i64: 16, 128>}, {transform_indices = @transform_8, window_bounds = array<i64: 16, 768>}]} {
    %c0 = arith.constant 0 : index
    %c0_0 = arith.constant 0 : index
    %0 = vector.load %arg2[%c0, %c0_0] : memref<16x768xbf16, #tpu.memory_space<vmem>>, vector<16x768xbf16>
    %1 = arith.extf %0 : vector<16x768xbf16> to vector<16x768xf32>
    %c0_1 = arith.constant 0 : index
    %c0_2 = arith.constant 0 : index
    %2 = vector.load %arg3[%c0_1, %c0_2] : memref<16x768xbf16, #tpu.memory_space<vmem>>, vector<16x768xbf16>
    %3 = arith.extf %2 : vector<16x768xbf16> to vector<16x768xf32>
    %c0_3 = arith.constant 0 : index
    %c0_4 = arith.constant 0 : index
    %4 = vector.load %arg1[%c0_3, %c0_4] : memref<1x768xf32, #tpu.memory_space<vmem>>, vector<1x768xf32>
    %5 = vector.broadcast %4 : vector<1x768xf32> to vector<16x768xf32>
    %6 = arith.mulf %5, %1 : vector<16x768xf32>
    %7 = arith.negf %6 : vector<16x768xf32>
    %8 = math.exp %7 : vector<16x768xf32>
    %cst = arith.constant 1.000000e+00 : f32
    %9 = vector.broadcast %cst : f32 to vector<16x768xf32>
    %10 = arith.addf %9, %8 : vector<16x768xf32>
    %11 = arith.divf %9, %10 : vector<16x768xf32>
    %12 = arith.subf %1, %3 : vector<16x768xf32>
    %13 = arith.mulf %11, %12 : vector<16x768xf32>
    %14 = arith.addf %3, %13 : vector<16x768xf32>
    %c0_5 = arith.constant 0 : index
    %c0_6 = arith.constant 0 : index
    %15 = vector.load %arg9[%c0_5, %c0_6] : memref<16x768xf32, #tpu.memory_space<vmem>>, vector<16x768xf32>
    tpu.vector_store %arg9[%c0_5, %c0_6], %14 {strides = array<i32>} : memref<16x768xf32, #tpu.memory_space<vmem>>, vector<16x768xf32>,
    %c0_7 = arith.constant 0 : index
    %c0_8 = arith.constant 0 : index
    %16 = vector.load %arg4[%c0_7, %c0_8] : memref<768x128xf32, #tpu.memory_space<vmem>>, vector<768x128xf32>
    %cst_9 = arith.constant dense<0.000000e+00> : vector<16x128xf32>
    %17 = tpu.matmul %14, %16, %cst_9 {dimension_numbers = #tpu.dot_dimension_numbers<[1], [0], [0], [1], [0, 0, 1, 1], [], []>} : vector<16x768xf32>, vector<768x128xf32>, vector<16x128xf32> -> vector<16x128xf32>
    %c0_10 = arith.constant 0 : index
    %c0_11 = arith.constant 0 : index
    %18 = vector.load %arg5[%c0_10, %c0_11] : memref<1x128xf32, #tpu.memory_space<vmem>>, vector<1x128xf32>
    %19 = vector.broadcast %18 : vector<1x128xf32> to vector<16x128xf32>
    %20 = arith.addf %17, %19 : vector<16x128xf32>
    %cst_12 = arith.constant 0.000000e+00 : f32
    %21 = vector.broadcast %cst_12 : f32 to vector<16x128xf32>
    %22 = arith.maximumf %20, %21 : vector<16x128xf32>
    %c0_13 = arith.constant 0 : index
    %c0_14 = arith.constant 0 : index
    %23 = vector.load %arg6[%c0_13, %c0_14] : memref<128x128xf32, #tpu.memory_space<vmem>>, vector<128x128xf32>
    %cst_15 = arith.constant dense<0.000000e+00> : vector<16x128xf32>
    %24 = tpu.matmul %22, %23, %cst_15 {dimension_numbers = #tpu.dot_dimension_numbers<[1], [0], [0], [1], [0, 0, 1, 1], [], []>} : vector<16x128xf32>, vector<128x128xf32>, vector<16x128xf32> -> vector<16x128xf32>
    %c0_16 = arith.constant 0 : index
    %c0_17 = arith.constant 0 : index
    %25 = vector.load %arg7[%c0_16, %c0_17] : memref<1x128xf32, #tpu.memory_space<vmem>>, vector<1x128xf32>
    %26 = vector.broadcast %25 : vector<1x128xf32> to vector<16x128xf32>
    %27 = arith.addf %24, %26 : vector<16x128xf32>
    %c0_18 = arith.constant 0 : index
    %c0_19 = arith.constant 0 : index
    %28 = vector.load %arg8[%c0_18, %c0_19] : memref<16x128xf32, #tpu.memory_space<vmem>>, vector<16x128xf32>
    tpu.vector_store %arg8[%c0_18, %c0_19], %27 {strides = array<i32>} : memref<16x128xf32, #tpu.memory_space<vmem>>, vector<16x128xf32>,
    return
  }
  func.func @transform_0(%arg0: i32) -> (i32, i32) {
    %c0_i32 = arith.constant 0 : i32
    %c0_i32_0 = arith.constant 0 : i32
    %c0_i32_1 = arith.constant 0 : i32
    return %c0_i32, %c0_i32_0 : i32, i32
  }
  func.func @transform_1(%arg0: i32) -> (i32, i32) {
    %c0_i32 = arith.constant 0 : i32
    %c0_i32_0 = arith.constant 0 : i32
    return %arg0, %c0_i32 : i32, i32
  }
  func.func @transform_2(%arg0: i32) -> (i32, i32) {
    %c0_i32 = arith.constant 0 : i32
    %c0_i32_0 = arith.constant 0 : i32
    return %arg0, %c0_i32 : i32, i32
  }
  func.func @transform_3(%arg0: i32) -> (i32, i32) {
    %c0_i32 = arith.constant 0 : i32
    %c0_i32_0 = arith.constant 0 : i32
    %c0_i32_1 = arith.constant 0 : i32
    return %c0_i32, %c0_i32_0 : i32, i32
  }
  func.func @transform_4(%arg0: i32) -> (i32, i32) {
    %c0_i32 = arith.constant 0 : i32
    %c0_i32_0 = arith.constant 0 : i32
    %c0_i32_1 = arith.constant 0 : i32
    return %c0_i32, %c0_i32_0 : i32, i32
  }
  func.func @transform_5(%arg0: i32) -> (i32, i32) {
    %c0_i32 = arith.constant 0 : i32
    %c0_i32_0 = arith.constant 0 : i32
    %c0_i32_1 = arith.constant 0 : i32
    return %c0_i32, %c0_i32_0 : i32, i32
  }
  func.func @transform_6(%arg0: i32) -> (i32, i32) {
    %c0_i32 = arith.constant 0 : i32
    %c0_i32_0 = arith.constant 0 : i32
    %c0_i32_1 = arith.constant 0 : i32
    return %c0_i32, %c0_i32_0 : i32, i32
  }
  func.func @transform_7(%arg0: i32) -> (i32, i32) {
    %c0_i32 = arith.constant 0 : i32
    %c0_i32_0 = arith.constant 0 : i32
    return %arg0, %c0_i32 : i32, i32
  }
  func.func @transform_8(%arg0: i32) -> (i32, i32) {
    %c0_i32 = arith.constant 0 : i32
    %c0_i32_0 = arith.constant 0 : i32
    return %arg0, %c0_i32 : i32, i32
  }
}

module attributes {stable_mosaic.version = 11 : i64} {
  func.func @fusion_cls_kernel(%arg0: i32, %arg1: memref<1x768xf32, #tpu.memory_space<vmem>>, %arg2: memref<16x768xbf16, #tpu.memory_space<vmem>>, %arg3: memref<16x768xbf16, #tpu.memory_space<vmem>>, %arg4: memref<768x128xf32, #tpu.memory_space<vmem>>, %arg5: memref<1x128xf32, #tpu.memory_space<vmem>>, %arg6: memref<128x128xf32, #tpu.memory_space<vmem>>, %arg7: memref<1x128xf32, #tpu.memory_space<vmem>>, %arg8: memref<16x128xf32, #tpu.memory_space<vmem>>, %arg9: memref<16x768xf32, #tpu.memory_space<vmem>>) attributes {dimension_semantics = [#tpu.dimension_semantics<parallel>], iteration_bounds = array<i64: 2>, scalar_prefetch = 0 : i64, scratch_operands = 0 : i64, tpu.core_type = #tpu.core_type<tc>, window_params = [{pipeline_mode = #tpu.pipeline_mode<synchronous>, transform_indices = @transform_0, window_bounds = array<i64: 1, 768>}, {transform_indices = @transform_1, window_bounds = array<i64: 16, 768>}, {transform_indices = @transform_2, window_bounds = array<i64: 16, 768>}, {pipeline_mode = #tpu.pipeline_mode<synchronous>, transform_indices = @transform_3, window_bounds = array<i64: 768, 128>}, {pipeline_mode = #tpu.pipeline_mode<synchronous>, transform_indices = @transform_4, window_bounds = array<i64: 1, 128>}, {pipeline_mode = #tpu.pipeline_mode<synchronous>, transform_indices = @transform_5, window_bounds = array<i64: 128, 128>}, {pipeline_mode = #tpu.pipeline_mode<synchronous>, transform_indices = @transform_6, window_bounds = array<i64: 1, 128>}, {transform_indices = @transform_7, window_bounds = array<i64: 16, 128>}, {transform_indices = @transform_8, window_bounds = array<i64: 16, 768>}]} {
    %c0 = arith.constant 0 : index
    %c0_0 = arith.constant 0 : index
    %0 = vector.load %arg2[%c0, %c0_0] : memref<16x768xbf16, #tpu.memory_space<vmem>>, vector<16x768xbf16>
    %1 = arith.extf %0 : vector<16x768xbf16> to vector<16x768xf32>
    %c0_1 = arith.constant 0 : index
    %c0_2 = arith.constant 0 : index
    %2 = vector.load %arg3[%c0_1, %c0_2] : memref<16x768xbf16, #tpu.memory_space<vmem>>, vector<16x768xbf16>
    %3 = arith.extf %2 : vector<16x768xbf16> to vector<16x768xf32>
    %c0_3 = arith.constant 0 : index
    %c0_4 = arith.constant 0 : index
    %4 = vector.load %arg1[%c0_3, %c0_4] : memref<1x768xf32, #tpu.memory_space<vmem>>, vector<1x768xf32>
    %5 = vector.broadcast %4 : vector<1x768xf32> to vector<16x768xf32>
    %6 = arith.mulf %5, %1 : vector<16x768xf32>
    %7 = arith.negf %6 : vector<16x768xf32>
    %8 = math.exp %7 : vector<16x768xf32>
    %cst = arith.constant 1.000000e+00 : f32
    %9 = vector.broadcast %cst : f32 to vector<16x768xf32>
    %10 = arith.addf %9, %8 : vector<16x768xf32>
    %11 = arith.divf %9, %10 : vector<16x768xf32>
    %12 = arith.subf %1, %3 : vector<16x768xf32>
    %13 = arith.mulf %11, %12 : vector<16x768xf32>
    %14 = arith.addf %3, %13 : vector<16x768xf32>
    %c0_5 = arith.constant 0 : index
    %c0_6 = arith.constant 0 : index
    %15 = vector.load %arg9[%c0_5, %c0_6] : memref<16x768xf32, #tpu.memory_space<vmem>>, vector<16x768xf32>
    tpu.vector_store %arg9[%c0_5, %c0_6], %14 {strides = array<i32>} : memref<16x768xf32, #tpu.memory_space<vmem>>, vector<16x768xf32>,
    %c0_7 = arith.constant 0 : index
    %c0_8 = arith.constant 0 : index
    %16 = vector.load %arg4[%c0_7, %c0_8] : memref<768x128xf32, #tpu.memory_space<vmem>>, vector<768x128xf32>
    %cst_9 = arith.constant dense<0.000000e+00> : vector<16x128xf32>
    %17 = tpu.matmul %14, %16, %cst_9 {dimension_numbers = #tpu.dot_dimension_numbers<[1], [0], [0], [1], [0, 0, 1, 1], [], []>} : vector<16x768xf32>, vector<768x128xf32>, vector<16x128xf32> -> vector<16x128xf32>
    %c0_10 = arith.constant 0 : index
    %c0_11 = arith.constant 0 : index
    %18 = vector.load %arg5[%c0_10, %c0_11] : memref<1x128xf32, #tpu.memory_space<vmem>>, vector<1x128xf32>
    %19 = vector.broadcast %18 : vector<1x128xf32> to vector<16x128xf32>
    %20 = arith.addf %17, %19 : vector<16x128xf32>
    %cst_12 = arith.constant 0.000000e+00 : f32
    %21 = vector.broadcast %cst_12 : f32 to vector<16x128xf32>
    %22 = arith.maximumf %20, %21 : vector<16x128xf32>
    %c0_13 = arith.constant 0 : index
    %c0_14 = arith.constant 0 : index
    %23 = vector.load %arg6[%c0_13, %c0_14] : memref<128x128xf32, #tpu.memory_space<vmem>>, vector<128x128xf32>
    %cst_15 = arith.constant dense<0.000000e+00> : vector<16x128xf32>
    %24 = tpu.matmul %22, %23, %cst_15 {dimension_numbers = #tpu.dot_dimension_numbers<[1], [0], [0], [1], [0, 0, 1, 1], [], []>} : vector<16x128xf32>, vector<128x128xf32>, vector<16x128xf32> -> vector<16x128xf32>
    %c0_16 = arith.constant 0 : index
    %c0_17 = arith.constant 0 : index
    %25 = vector.load %arg7[%c0_16, %c0_17] : memref<1x128xf32, #tpu.memory_space<vmem>>, vector<1x128xf32>
    %26 = vector.broadcast %25 : vector<1x128xf32> to vector<16x128xf32>
    %27 = arith.addf %24, %26 : vector<16x128xf32>
    %c0_18 = arith.constant 0 : index
    %c0_19 = arith.constant 0 : index
    %28 = vector.load %arg8[%c0_18, %c0_19] : memref<16x128xf32, #tpu.memory_space<vmem>>, vector<16x128xf32>
    tpu.vector_store %arg8[%c0_18, %c0_19], %27 {strides = array<i32>} : memref<16x128xf32, #tpu.memory_space<vmem>>, vector<16x128xf32>,
    return
  }
  func.func @transform_0(%arg0: i32) -> (i32, i32) {
    %c0_i32 = arith.constant 0 : i32
    %c0_i32_0 = arith.constant 0 : i32
    %c0_i32_1 = arith.constant 0 : i32
    return %c0_i32, %c0_i32_0 : i32, i32
  }
  func.func @transform_1(%arg0: i32) -> (i32, i32) {
    %c0_i32 = arith.constant 0 : i32
    %c0_i32_0 = arith.constant 0 : i32
    return %arg0, %c0_i32 : i32, i32
  }
  func.func @transform_2(%arg0: i32) -> (i32, i32) {
    %c0_i32 = arith.constant 0 : i32
    %c0_i32_0 = arith.constant 0 : i32
    return %arg0, %c0_i32 : i32, i32
  }
  func.func @transform_3(%arg0: i32) -> (i32, i32) {
    %c0_i32 = arith.constant 0 : i32
    %c0_i32_0 = arith.constant 0 : i32
    %c0_i32_1 = arith.constant 0 : i32
    return %c0_i32, %c0_i32_0 : i32, i32
  }
  func.func @transform_4(%arg0: i32) -> (i32, i32) {
    %c0_i32 = arith.constant 0 : i32
    %c0_i32_0 = arith.constant 0 : i32
    %c0_i32_1 = arith.constant 0 : i32
    return %c0_i32, %c0_i32_0 : i32, i32
  }
  func.func @transform_5(%arg0: i32) -> (i32, i32) {
    %c0_i32 = arith.constant 0 : i32
    %c0_i32_0 = arith.constant 0 : i32
    %c0_i32_1 = arith.constant 0 : i32
    return %c0_i32, %c0_i32_0 : i32, i32
  }
  func.func @transform_6(%arg0: i32) -> (i32, i32) {
    %c0_i32 = arith.constant 0 : i32
    %c0_i32_0 = arith.constant 0 : i32
    %c0_i32_1 = arith.constant 0 : i32
    return %c0_i32, %c0_i32_0 : i32, i32
  }
  func.func @transform_7(%arg0: i32) -> (i32, i32) {
    %c0_i32 = arith.constant 0 : i32
    %c0_i32_0 = arith.constant 0 : i32
    return %arg0, %c0_i32 : i32, i32
  }
  func.func @transform_8(%arg0: i32) -> (i32, i32) {
    %c0_i32 = arith.constant 0 : i32
    %c0_i32_0 = arith.constant 0 : i32
    return %arg0, %c0_i32 : i32, i32
  }
}

</mosaic_0001>

<llo_original>
// kernel: tpu_custom_call.1
$region0: #{tpu_custom_call.1}
  #allocation0 [shape = 'u32[]', space=smem, size = 0x4, offset = 0x4, fixed_abs, tag = 'smem constant byte address 0x4 - core index']
  #allocation1 [shape = 'u32[144,128]{1,0:T(1,128)}', space=vmem, size = 0x12000, scoped, tag = 'internal scratch']
  %s0 = inlined_call_operand.hbm [shape: f32[1,768], index: 0, kind: input, shape index: {}]
  %s1 = inlined_call_operand.hbm [shape: bf16[32,768], index: 1, kind: input, shape index: {}]
  %s2 = inlined_call_operand.hbm [shape: bf16[32,768], index: 2, kind: input, shape index: {}]
  %s3 = inlined_call_operand.hbm [shape: f32[768,128], index: 3, kind: input, shape index: {}]
  %s4 = inlined_call_operand.vmem [shape: f32[1,128], index: 4, kind: input, shape index: {}]
  %s5 = inlined_call_operand.hbm [shape: f32[128,128], index: 5, kind: input, shape index: {}]
  %s6 = inlined_call_operand.vmem [shape: f32[1,128], index: 6, kind: input, shape index: {}]
  %s7 = inlined_call_operand.hbm [shape: f32[32,128], index: 7, kind: output, shape index: {0}]
  %s8 = inlined_call_operand.hbm [shape: f32[32,768], index: 8, kind: output, shape index: {1}]
  %9 = xla_tuple %s7, %s8
  %s10 = sld [smem:[#allocation0]]
  $region89: #{tpu_custom_call.1} parent=0
    _
  %s12 = ssub.s32 1, %s10
  %s13 = scalar_select 0, %s12, %s10
  $region1: #{tpu_custom_call.1} parent=0
    #allocation2 [shape = 'u8[3072]{0}', space=vmem, size = 0xc00, scoped, tag = 'input window, operand 0, single buffered']
    #allocation3 [shape = 's32[2]{0}', space=sflag, size = 0x8, scoped, tag = 'scoped memory for tpu_custom_call.1']
    #allocation4 [shape = 's32[2]{0}', space=sflag, size = 0x8, scoped, tag = 'scoped memory for tpu_custom_call.1']
    #allocation5 [shape = 'u8[49152]{0}', space=vmem, size = 0xc000, scoped, tag = 'input window, operand 1']
    #allocation6 [shape = 's32[2]{0}', space=sflag, size = 0x8, scoped, tag = 'scoped memory for tpu_custom_call.1']
    #allocation7 [shape = 'u8[49152]{0}', space=vmem, size = 0xc000, scoped, tag = 'input window, operand 2']
    #allocation8 [shape = 'u8[393216]{0}', space=vmem, size = 0x60000, scoped, tag = 'input window, operand 3, single buffered']
    #allocation9 [shape = 's32[1]{0}', space=sflag, size = 0x4, scoped, tag = 'scoped memory for tpu_custom_call.1']
    #allocation10 [shape = 'u8[65536]{0}', space=vmem, size = 0x10000, scoped, tag = 'input window, operand 5, single buffered']
    #allocation11 [shape = 'u8[16384]{0}', space=vmem, size = 0x4000, scoped, tag = 'output window, operand 0']
    #allocation12 [shape = 'u8[98304]{0}', space=vmem, size = 0x18000, scoped, tag = 'output window, operand 1']
    #allocation13 [shape = 's32[2]{0}', space=sflag, size = 0x8, scoped, tag = 'scoped memory for tpu_custom_call.1']
    %14 = vsyncpa [#allocation3], 0
    %15 = vsyncpa [#allocation6], 0
    %s16 = scalar_lea.sflag [#allocation6], 1
    %17 = vsyncpa %s16, 0
    %18 = vsyncpa [#allocation9], 0
    %19 = vsyncpa [#allocation4], 0
    %s20 = scalar_lea.sflag [#allocation4], 1
    %21 = vsyncpa %s20, 0
    %22 = vsyncpa [#allocation13], 0
    %s23 = scalar_lea.sflag [#allocation13], 1
    %24 = vsyncpa %s23, 0
    loop: start=0, step=1, limit=4
    $region2: #{tpu_custom_call.1} parent=1 // loop_pre_header
      _
    $region3: #{tpu_custom_call.1} parent=1 // loop_header
      %s26 = sphi 0, %s30
      %p27 = scmp.ge.s32.totalorder %s26, 4
      %s34 = sphi 0, %s34
      %s36 = sphi 0, %s34
      %s37 = sphi 0, %s36
      %s51 = sphi 0, %s37
      %s57 = sphi 0, %s59
      %s60 = sphi 0, %s57
      %s61 = sphi 0, %s60
      %s77 = sphi 0, %s61
      %s83 = sphi 0, %s85
      %s86 = sphi 0, %s83
      %s87 = sphi 0, %s86
      %s103 = sphi 0, %s87
      %s107 = sphi 0, %s107
      %s109 = sphi 0, %s107
      %s110 = sphi 0, %s109
      %s124 = sphi 0, %s110
      %s128 = sphi 0, %s128
      %s130 = sphi 0, %s128
      %s131 = sphi 0, %s130
      %s145 = sphi 0, %s131
      %s149 = sphi 0, %s149
      %s151 = sphi 0, %s149
      %s152 = sphi 0, %s151
      %s166 = sphi 0, %s152
      %s170 = sphi 0, %s170
      %s172 = sphi 0, %s170
      %s173 = sphi 0, %s172
      %s187 = sphi 0, %s173
      %s193 = sphi 0, %s195
      %s196 = sphi 0, %s193
      %s197 = sphi 0, %s196
      %s213 = sphi 0, %s197
      %s219 = sphi 0, %s221
      %s222 = sphi 0, %s219
      %s223 = sphi 0, %s222
      %s239 = sphi 0, %s223
    $region4: #{tpu_custom_call.1} parent=1 // loop_header_branch
      %29 = sbr.rel (%p27) target = $region8
    $region5: #{tpu_custom_call.1} parent=1 // loop_body
      %s31 = ssub.s32 %s26, 1
      %s32 = ssub.s32 %s26, 2
      %s33 = sadd.s32 %s26, 1
      %s35 = sadd.s32 %s34, 1
      %p38 = scmp.eq.s32.totalorder %s26, 1
      %p39 = scmp.ne.s32.totalorder %s34, %s36
      %p40 = scmp.eq.s32.totalorder %s26, 0
      %p41 = por %p39, %p40
      %p42 = scmp.ne.s32.totalorder %s34, %s36
      %p43 = scmp.eq.s32.totalorder %s31, 1
      %p44 = por %p42, %p43
      %p45 = scmp.ne.s32.totalorder %s36, %s37
      %p46 = scmp.eq.s32.totalorder %s31, 0
      %p47 = por %p45, %p46
      %p48 = scmp.ne.s32.totalorder %s36, %s37
      %p49 = scmp.eq.s32.totalorder %s32, 1
      %p50 = por %p48, %p49
      %p52 = scmp.ne.s32.totalorder %s37, %s51
      %p53 = scmp.eq.s32.totalorder %s32, 0
      %p54 = por %p52, %p53
      %s55 = ssub.s32 %s26, %s33
      %p56 = scmp.eq.s32.totalorder %s55, 0
      %s58 = sadd.s32 %s57, 1
      %s59 = scalar_select %p56, %s57, %s58
      %p62 = pneg %p56
      %p63 = scmp.eq.s32.totalorder %s26, 1
      %p64 = por %p62, %p63
      %p65 = scmp.ne.s32.totalorder %s57, %s60
      %p66 = scmp.eq.s32.totalorder %s26, 0
      %p67 = por %p65, %p66
      %p68 = scmp.ne.s32.totalorder %s57, %s60
      %p69 = scmp.eq.s32.totalorder %s31, 1
      %p70 = por %p68, %p69
      %p71 = scmp.ne.s32.totalorder %s60, %s61
      %p72 = scmp.eq.s32.totalorder %s31, 0
      %p73 = por %p71, %p72
      %p74 = scmp.ne.s32.totalorder %s60, %s61
      %p75 = scmp.eq.s32.totalorder %s32, 1
      %p76 = por %p74, %p75
      %p78 = scmp.ne.s32.totalorder %s61, %s77
      %p79 = scmp.eq.s32.totalorder %s32, 0
      %p80 = por %p78, %p79
      %s81 = ssub.s32 %s26, %s33
      %p82 = scmp.eq.s32.totalorder %s81, 0
      %s84 = sadd.s32 %s83, 1
      %s85 = scalar_select %p82, %s83, %s84
      %p88 = pneg %p82
      %p89 = scmp.eq.s32.totalorder %s26, 1
      %p90 = por %p88, %p89
      %p91 = scmp.ne.s32.totalorder %s83, %s86
      %p92 = scmp.eq.s32.totalorder %s26, 0
      %p93 = por %p91, %p92
      %p94 = scmp.ne.s32.totalorder %s83, %s86
      %p95 = scmp.eq.s32.totalorder %s31, 1
      %p96 = por %p94, %p95
      %p97 = scmp.ne.s32.totalorder %s86, %s87
      %p98 = scmp.eq.s32.totalorder %s31, 0
      %p99 = por %p97, %p98
      %p100 = scmp.ne.s32.totalorder %s86, %s87
      %p101 = scmp.eq.s32.totalorder %s32, 1
      %p102 = por %p100, %p101
      %p104 = scmp.ne.s32.totalorder %s87, %s103
      %p105 = scmp.eq.s32.totalorder %s32, 0
      %p106 = por %p104, %p105
      %s108 = sadd.s32 %s107, 1
      %p111 = scmp.eq.s32.totalorder %s26, 1
      %p112 = scmp.ne.s32.totalorder %s107, %s109
      %p113 = scmp.eq.s32.totalorder %s26, 0
      %p114 = por %p112, %p113
      %p115 = scmp.ne.s32.totalorder %s107, %s109
      %p116 = scmp.eq.s32.totalorder %s31, 1
      %p117 = por %p115, %p116
      %p118 = scmp.ne.s32.totalorder %s109, %s110
      %p119 = scmp.eq.s32.totalorder %s31, 0
      %p120 = por %p118, %p119
      %p121 = scmp.ne.s32.totalorder %s109, %s110
      %p122 = scmp.eq.s32.totalorder %s32, 1
      %p123 = por %p121, %p122
      %p125 = scmp.ne.s32.totalorder %s110, %s124
      %p126 = scmp.eq.s32.totalorder %s32, 0
      %p127 = por %p125, %p126
      %s129 = sadd.s32 %s128, 1
      %p132 = scmp.eq.s32.totalorder %s26, 1
      %p133 = scmp.ne.s32.totalorder %s128, %s130
      %p134 = scmp.eq.s32.totalorder %s26, 0
      %p135 = por %p133, %p134
      %p136 = scmp.ne.s32.totalorder %s128, %s130
      %p137 = scmp.eq.s32.totalorder %s31, 1
      %p138 = por %p136, %p137
      %p139 = scmp.ne.s32.totalorder %s130, %s131
      %p140 = scmp.eq.s32.totalorder %s31, 0
      %p141 = por %p139, %p140
      %p142 = scmp.ne.s32.totalorder %s130, %s131
      %p143 = scmp.eq.s32.totalorder %s32, 1
      %p144 = por %p142, %p143
      %p146 = scmp.ne.s32.totalorder %s131, %s145
      %p147 = scmp.eq.s32.totalorder %s32, 0
      %p148 = por %p146, %p147
      %s150 = sadd.s32 %s149, 1
      %p153 = scmp.eq.s32.totalorder %s26, 1
      %p154 = scmp.ne.s32.totalorder %s149, %s151
      %p155 = scmp.eq.s32.totalorder %s26, 0
      %p156 = por %p154, %p155
      %p157 = scmp.ne.s32.totalorder %s149, %s151
      %p158 = scmp.eq.s32.totalorder %s31, 1
      %p159 = por %p157, %p158
      %p160 = scmp.ne.s32.totalorder %s151, %s152
      %p161 = scmp.eq.s32.totalorder %s31, 0
      %p162 = por %p160, %p161
      %p163 = scmp.ne.s32.totalorder %s151, %s152
      %p164 = scmp.eq.s32.totalorder %s32, 1
      %p165 = por %p163, %p164
      %p167 = scmp.ne.s32.totalorder %s152, %s166
      %p168 = scmp.eq.s32.totalorder %s32, 0
      %p169 = por %p167, %p168
      %s171 = sadd.s32 %s170, 1
      %p174 = scmp.eq.s32.totalorder %s26, 1
      %p175 = scmp.ne.s32.totalorder %s170, %s172
      %p176 = scmp.eq.s32.totalorder %s26, 0
      %p177 = por %p175, %p176
      %p178 = scmp.ne.s32.totalorder %s170, %s172
      %p179 = scmp.eq.s32.totalorder %s31, 1
      %p180 = por %p178, %p179
      %p181 = scmp.ne.s32.totalorder %s172, %s173
      %p182 = scmp.eq.s32.totalorder %s31, 0
      %p183 = por %p181, %p182
      %p184 = scmp.ne.s32.totalorder %s172, %s173
      %p185 = scmp.eq.s32.totalorder %s32, 1
      %p186 = por %p184, %p185
      %p188 = scmp.ne.s32.totalorder %s173, %s187
      %p189 = scmp.eq.s32.totalorder %s32, 0
      %p190 = por %p188, %p189
      %s191 = ssub.s32 %s26, %s33
      %p192 = scmp.eq.s32.totalorder %s191, 0
      %s194 = sadd.s32 %s193, 1
      %s195 = scalar_select %p192, %s193, %s194
      %p198 = pneg %p192
      %p199 = scmp.eq.s32.totalorder %s26, 1
      %p200 = por %p198, %p199
      %p201 = scmp.ne.s32.totalorder %s193, %s196
      %p202 = scmp.eq.s32.totalorder %s26, 0
      %p203 = por %p201, %p202
      %p204 = scmp.ne.s32.totalorder %s193, %s196
      %p205 = scmp.eq.s32.totalorder %s31, 1
      %p206 = por %p204, %p205
      %p207 = scmp.ne.s32.totalorder %s196, %s197
      %p208 = scmp.eq.s32.totalorder %s31, 0
      %p209 = por %p207, %p208
      %p210 = scmp.ne.s32.totalorder %s196, %s197
      %p211 = scmp.eq.s32.totalorder %s32, 1
      %p212 = por %p210, %p211
      %p214 = scmp.ne.s32.totalorder %s197, %s213
      %p215 = scmp.eq.s32.totalorder %s32, 0
      %p216 = por %p214, %p215
      %s217 = ssub.s32 %s26, %s33
      %p218 = scmp.eq.s32.totalorder %s217, 0
      %s220 = sadd.s32 %s219, 1
      %s221 = scalar_select %p218, %s219, %s220
      %p224 = pneg %p218
      %p225 = scmp.eq.s32.totalorder %s26, 1
      %p226 = por %p224, %p225
      %p227 = scmp.ne.s32.totalorder %s219, %s222
      %p228 = scmp.eq.s32.totalorder %s26, 0
      %p229 = por %p227, %p228
      %p230 = scmp.ne.s32.totalorder %s219, %s222
      %p231 = scmp.eq.s32.totalorder %s31, 1
      %p232 = por %p230, %p231
      %p233 = scmp.ne.s32.totalorder %s222, %s223
      %p234 = scmp.eq.s32.totalorder %s31, 0
      %p235 = por %p233, %p234
      %p236 = scmp.ne.s32.totalorder %s222, %s223
      %p237 = scmp.eq.s32.totalorder %s32, 1
      %p238 = por %p236, %p237
      %p240 = scmp.ne.s32.totalorder %s223, %s239
      %p241 = scmp.eq.s32.totalorder %s32, 0
      %p242 = por %p240, %p241
      %p243 = scmp.le.s32.totalorder 1, %s26
      %p244 = scmp.lt.s32.totalorder %s26, 3
      %p245 = pnand %p243, %p244
      %p246 = pneg %p245
      // Predicated region
      $region9: #{tpu_custom_call.1} parent=5 // pred_check
        _
      $region10: #{tpu_custom_call.1} parent=5 // pred_check_branch
        %248 = sbr.rel (%p245) target = $region12
      $region11: #{tpu_custom_call.1} parent=5 // pred_region
        %s249 = ssub.s32 %s26, 1
        // Predicated region
        $region13: #{tpu_custom_call.1} parent=11 // pred_check
          %p250 = pneg %p47
        $region14: #{tpu_custom_call.1} parent=11 // pred_check_branch
          %252 = sbr.rel (%p250) target = $region16
        $region15: #{tpu_custom_call.1} parent=11 // pred_region
          %s254 = ssub.s32 96, 96
          %255 = vsyncadd [#allocation3], %s254
          %s257 = sshll.u32 [#allocation2], 4
          %s258 = int_to_ptr.vmem [resolvable:$true] %s257
          %260 = dma.hbm_to_vmem [thread:$0]  %s0, 96, %s258, [#allocation3]
        $region16: #{tpu_custom_call.1} parent=11 // pred_fallthru
          _
        // Predicated region
        $region17: #{tpu_custom_call.1} parent=11 // pred_check
          %p261 = pneg %p120
        $region18: #{tpu_custom_call.1} parent=11 // pred_check_branch
          %263 = sbr.rel (%p261) target = $region20
        $region19: #{tpu_custom_call.1} parent=11 // pred_region
          %s265 = ssub.s32 12288, 12288
          %266 = vsyncadd [#allocation9], %s265
          %s267 = sshll.u32 [#allocation8], 4
          %s268 = int_to_ptr.vmem [resolvable:$true] %s267
          %273 = dma.hbm_to_vmem [thread:$0]  %s3, 12288, %s268, [#allocation9], 128, 128, 8
        $region20: #{tpu_custom_call.1} parent=11 // pred_fallthru
          _
        // Predicated region
        $region21: #{tpu_custom_call.1} parent=11 // pred_check
          %p274 = pneg %p141
        $region22: #{tpu_custom_call.1} parent=11 // pred_check_branch
          %276 = sbr.rel (%p274) target = $region24
        $region23: #{tpu_custom_call.1} parent=11 // pred_region
          _
        $region24: #{tpu_custom_call.1} parent=11 // pred_fallthru
          _
        // Predicated region
        $region25: #{tpu_custom_call.1} parent=11 // pred_check
          %p277 = pneg %p162
        $region26: #{tpu_custom_call.1} parent=11 // pred_check_branch
          %279 = sbr.rel (%p277) target = $region28
        $region27: #{tpu_custom_call.1} parent=11 // pred_region
          %s281 = ssub.s32 2048, 2048
          %282 = vsyncadd [#allocation9], %s281
          %s283 = sshll.u32 [#allocation10], 4
          %s284 = int_to_ptr.vmem [resolvable:$true] %s283
          %289 = dma.hbm_to_vmem [thread:$0]  %s5, 2048, %s284, [#allocation9], 128, 128, 8
        $region28: #{tpu_custom_call.1} parent=11 // pred_fallthru
          _
        // Predicated region
        $region29: #{tpu_custom_call.1} parent=11 // pred_check
          %p290 = pneg %p183
        $region30: #{tpu_custom_call.1} parent=11 // pred_check_branch
          %292 = sbr.rel (%p290) target = $region32
        $region31: #{tpu_custom_call.1} parent=11 // pred_region
          _
        $region32: #{tpu_custom_call.1} parent=11 // pred_fallthru
          _
      $region12: #{tpu_custom_call.1} parent=5 // pred_fallthru
        _
      %p293 = scmp.lt.s32.totalorder %s26, 2
      // Predicated region
      $region33: #{tpu_custom_call.1} parent=5 // pred_check
        %p294 = pneg %p293
      $region34: #{tpu_custom_call.1} parent=5 // pred_check_branch
        %296 = sbr.rel (%p294) target = $region36
      $region35: #{tpu_custom_call.1} parent=5 // pred_region
        // Predicated region
        $region37: #{tpu_custom_call.1} parent=35 // pred_check
          %p297 = pneg %p67
        $region38: #{tpu_custom_call.1} parent=35 // pred_check_branch
          %299 = sbr.rel (%p297) target = $region40
        $region39: #{tpu_custom_call.1} parent=35 // pred_region
          %s300 = sand.u32 %s26, 1
          %s301 = scalar_lea.sflag [#allocation6], %s300
          %s302 = sand.u32 %s57, 1
          %s303 = smul.addr %s302, 48
          %s304 = scalar_lea.vmem [#allocation5], %s303
          %s305 = smul.u32 2, %s26
          %s307 = ssub.s32 768, 768
          %308 = vsyncadd %s301, %s307
          %s309 = smul.addr %s305, 6
          %s310 = smul.addr %s309, 64
          %s311 = scalar_lea.hbm %s1, %s310
          %s312 = sshll.u32 %s304, 4
          %s313 = int_to_ptr.vmem [resolvable:$true] %s312
          %318 = dma.hbm_to_vmem [thread:$0]  %s311, 768, %s313, %s301, 384, 384, 24
        $region40: #{tpu_custom_call.1} parent=35 // pred_fallthru
          _
        // Predicated region
        $region41: #{tpu_custom_call.1} parent=35 // pred_check
          %p319 = pneg %p93
        $region42: #{tpu_custom_call.1} parent=35 // pred_check_branch
          %321 = sbr.rel (%p319) target = $region44
        $region43: #{tpu_custom_call.1} parent=35 // pred_region
          %s322 = sand.u32 %s26, 1
          %s323 = scalar_lea.sflag [#allocation6], %s322
          %s324 = sand.u32 %s83, 1
          %s325 = smul.addr %s324, 48
          %s326 = scalar_lea.vmem [#allocation7], %s325
          %s327 = smul.u32 2, %s26
          %s329 = ssub.s32 768, 768
          %330 = vsyncadd %s323, %s329
          %s331 = smul.addr %s327, 6
          %s332 = smul.addr %s331, 64
          %s333 = scalar_lea.hbm %s2, %s332
          %s334 = sshll.u32 %s326, 4
          %s335 = int_to_ptr.vmem [resolvable:$true] %s334
          %340 = dma.hbm_to_vmem [thread:$0]  %s333, 768, %s335, %s323, 384, 384, 24
        $region44: #{tpu_custom_call.1} parent=35 // pred_fallthru
          _
      $region36: #{tpu_custom_call.1} parent=5 // pred_fallthru
        _
      %p341 = scmp.le.s32.totalorder 1, %s26
      %p342 = scmp.lt.s32.totalorder %s26, 3
      %p343 = pnand %p341, %p342
      %p344 = pneg %p343
      // Predicated region
      $region45: #{tpu_custom_call.1} parent=5 // pred_check
        _
      $region46: #{tpu_custom_call.1} parent=5 // pred_check_branch
        %346 = sbr.rel (%p343) target = $region48
      $region47: #{tpu_custom_call.1} parent=5 // pred_region
        %s347 = ssub.s32 %s26, 1
        // Predicated region
        $region49: #{tpu_custom_call.1} parent=47 // pred_check
          %p348 = pneg %p47
        $region50: #{tpu_custom_call.1} parent=47 // pred_check_branch
          %350 = sbr.rel (%p348) target = $region52
        $region51: #{tpu_custom_call.1} parent=47 // pred_region
          %351 = dma.done [#allocation3], 96
        $region52: #{tpu_custom_call.1} parent=47 // pred_fallthru
          _
        %s352 = sand.u32 %s31, 1
        %s353 = scalar_lea.sflag [#allocation6], %s352
        %s354 = sand.u32 %s60, 1
        %s355 = smul.addr %s354, 48
        %s356 = scalar_lea.vmem [#allocation5], %s355
        // Predicated region
        $region53: #{tpu_custom_call.1} parent=47 // pred_check
          %p357 = pneg %p73
        $region54: #{tpu_custom_call.1} parent=47 // pred_check_branch
          %359 = sbr.rel (%p357) target = $region56
        $region55: #{tpu_custom_call.1} parent=47 // pred_region
          %360 = dma.done %s353, 768
        $region56: #{tpu_custom_call.1} parent=47 // pred_fallthru
          _
        %s361 = sand.u32 %s31, 1
        %s362 = scalar_lea.sflag [#allocation6], %s361
        %s363 = sand.u32 %s86, 1
        %s364 = smul.addr %s363, 48
        %s365 = scalar_lea.vmem [#allocation7], %s364
        // Predicated region
        $region57: #{tpu_custom_call.1} parent=47 // pred_check
          %p366 = pneg %p99
        $region58: #{tpu_custom_call.1} parent=47 // pred_check_branch
          %368 = sbr.rel (%p366) target = $region60
        $region59: #{tpu_custom_call.1} parent=47 // pred_region
          %369 = dma.done %s362, 768
        $region60: #{tpu_custom_call.1} parent=47 // pred_fallthru
          _
        // Predicated region
        $region61: #{tpu_custom_call.1} parent=47 // pred_check
          %p370 = pneg %p120
        $region62: #{tpu_custom_call.1} parent=47 // pred_check_branch
          %372 = sbr.rel (%p370) target = $region64
        $region63: #{tpu_custom_call.1} parent=47 // pred_region
          %373 = dma.done [#allocation9], 12288
        $region64: #{tpu_custom_call.1} parent=47 // pred_fallthru
          _
        // Predicated region
        $region65: #{tpu_custom_call.1} parent=47 // pred_check
          %p374 = pneg %p162
        $region66: #{tpu_custom_call.1} parent=47 // pred_check_branch
          %376 = sbr.rel (%p374) target = $region68
        $region67: #{tpu_custom_call.1} parent=47 // pred_region
          %377 = dma.done [#allocation9], 2048
        $region68: #{tpu_custom_call.1} parent=47 // pred_fallthru
          _
        %p378 = pneg %p47
        %p379 = pneg %p44
        %s380 = sand.u32 %s31, 1
        %s381 = scalar_lea.sflag [#allocation6], %s380
        %s382 = sand.u32 %s60, 1
        %s383 = smul.addr %s382, 48
        %s384 = scalar_lea.vmem [#allocation5], %s383
        %p385 = pneg %p73
        %p386 = pneg %p70
        %s387 = sand.u32 %s31, 1
        %s388 = scalar_lea.sflag [#allocation6], %s387
        %s389 = sand.u32 %s86, 1
        %s390 = smul.addr %s389, 48
        %s391 = scalar_lea.vmem [#allocation7], %s390
        %p392 = pneg %p99
        %p393 = pneg %p96
        %p394 = pneg %p120
        %p395 = pneg %p117
        %p396 = pneg %p141
        %p397 = pneg %p138
        %p398 = pneg %p162
        %p399 = pneg %p159
        %p400 = pneg %p183
        %p401 = pneg %p180
        %p402 = pneg %p209
        %p403 = pneg %p206
        %s404 = sand.u32 %s196, 1
        %s405 = scalar_lea.sflag [#allocation4], %s404
        %s406 = sand.u32 %s196, 1
        %s407 = smul.addr %s406, 16
        %s408 = scalar_lea.vmem [#allocation11], %s407
        %p409 = pneg %p235
        %p410 = pneg %p232
        %s411 = sand.u32 %s222, 1
        %s412 = scalar_lea.sflag [#allocation13], %s411
        %s413 = sand.u32 %s222, 1
        %s414 = smul.addr %s413, 96
        %s415 = scalar_lea.vmem [#allocation12], %s414
        %s416 = smul.u32 2, %s31
        %s417 = smul.u32 2, %s31
        %s418 = smul.u32 2, %s31
        %s419 = smul.u32 2, %s31
        %v420 = vld [vmem:[%s356] sm:$0xff]
        %v421 = vld [vmem:[%s356 + $0x8] sm:$0xff]
        %v422 = vld [vmem:[%s356 + $0x10] sm:$0xff]
        %v423 = vld [vmem:[%s356 + $0x18] sm:$0xff]
        %v424 = vld [vmem:[%s356 + $0x20] sm:$0xff]
        %v425 = vld [vmem:[%s356 + $0x28] sm:$0xff]
        %v426 = vunpack.c.l.bf16 %v420
        %v427 = vunpack.c.h.bf16 %v420
        %v428 = vunpack.c.l.bf16 %v421
        %v429 = vunpack.c.h.bf16 %v421
        %v430 = vunpack.c.l.bf16 %v422
        %v431 = vunpack.c.h.bf16 %v422
        %v432 = vunpack.c.l.bf16 %v423
        %v433 = vunpack.c.h.bf16 %v423
        %v434 = vunpack.c.l.bf16 %v424
        %v435 = vunpack.c.h.bf16 %v424
        %v436 = vunpack.c.l.bf16 %v425
        %v437 = vunpack.c.h.bf16 %v425
        %v438 = vld [vmem:[%s365] sm:$0xff]
        %v439 = vld [vmem:[%s365 + $0x8] sm:$0xff]
        %v440 = vld [vmem:[%s365 + $0x10] sm:$0xff]
        %v441 = vld [vmem:[%s365 + $0x18] sm:$0xff]
        %v442 = vld [vmem:[%s365 + $0x20] sm:$0xff]
        %v443 = vld [vmem:[%s365 + $0x28] sm:$0xff]
        %v444 = vunpack.c.l.bf16 %v438
        %v445 = vunpack.c.h.bf16 %v438
        %v446 = vunpack.c.l.bf16 %v439
        %v447 = vunpack.c.h.bf16 %v439
        %v448 = vunpack.c.l.bf16 %v440
        %v449 = vunpack.c.h.bf16 %v440
        %v450 = vunpack.c.l.bf16 %v441
        %v451 = vunpack.c.h.bf16 %v441
        %v452 = vunpack.c.l.bf16 %v442
        %v453 = vunpack.c.h.bf16 %v442
        %v454 = vunpack.c.l.bf16 %v443
        %v455 = vunpack.c.h.bf16 %v443
        %v456 = vld [vmem:[#allocation2] sm:$0x3f]
        %v458 = vlaneseq
        %v459 = vshrl.u32 %v458, 7
        %v460 = vsub.s32 0, %v459
        %v461 = vrot.slane %v456, %v460
        %v462 = vlaneseq
        %v463 = vshrl.u32 %v462, 7
        %v464 = vsub.s32 1, %v463
        %v465 = vrot.slane %v456, %v464
        %v466 = vlaneseq
        %v467 = vshrl.u32 %v466, 7
        %v468 = vsub.s32 2, %v467
        %v469 = vrot.slane %v456, %v468
        %v470 = vlaneseq
        %v471 = vshrl.u32 %v470, 7
        %v472 = vsub.s32 3, %v471
        %v473 = vrot.slane %v456, %v472
        %v474 = vlaneseq
        %v475 = vshrl.u32 %v474, 7
        %v476 = vsub.s32 4, %v475
        %v477 = vrot.slane %v456, %v476
        %v478 = vlaneseq
        %v479 = vshrl.u32 %v478, 7
        %v480 = vsub.s32 5, %v479
        %v481 = vrot.slane %v456, %v480
        %v488 = vmul.f32 %v461, %v426
        %v489 = vmul.f32 %v465, %v427
        %v490 = vmul.f32 %v469, %v428
        %v491 = vmul.f32 %v473, %v429
        %v492 = vmul.f32 %v477, %v430
        %v493 = vmul.f32 %v481, %v431
        %v494 = vmul.f32 %v461, %v432
        %v495 = vmul.f32 %v465, %v433
        %v496 = vmul.f32 %v469, %v434
        %v497 = vmul.f32 %v473, %v435
        %v498 = vmul.f32 %v477, %v436
        %v499 = vmul.f32 %v481, %v437
        %v500 = vxor.u32 %v488, 2147483648
        %v501 = vxor.u32 %v489, 2147483648
        %v502 = vxor.u32 %v490, 2147483648
        %v503 = vxor.u32 %v491, 2147483648
        %v504 = vxor.u32 %v492, 2147483648
        %v505 = vxor.u32 %v493, 2147483648
        %v506 = vxor.u32 %v494, 2147483648
        %v507 = vxor.u32 %v495, 2147483648
        %v508 = vxor.u32 %v496, 2147483648
        %v509 = vxor.u32 %v497, 2147483648
        %v510 = vxor.u32 %v498, 2147483648
        %v511 = vxor.u32 %v499, 2147483648
        %v512 = vmul.f32 %v500, 1.442695
        %v513 = vpow.pop %v512
        %v514 = vmul.f32 %v501, 1.442695
        %v515 = vpow.pop %v514
        %v516 = vmul.f32 %v502, 1.442695
        %v517 = vpow.pop %v516
        %v518 = vmul.f32 %v503, 1.442695
        %v519 = vpow.pop %v518
        %v520 = vmul.f32 %v504, 1.442695
        %v521 = vpow.pop %v520
        %v522 = vmul.f32 %v505, 1.442695
        %v523 = vpow.pop %v522
        %v524 = vmul.f32 %v506, 1.442695
        %v525 = vpow.pop %v524
        %v526 = vmul.f32 %v507, 1.442695
        %v527 = vpow.pop %v526
        %v528 = vmul.f32 %v508, 1.442695
        %v529 = vpow.pop %v528
        %v530 = vmul.f32 %v509, 1.442695
        %v531 = vpow.pop %v530
        %v532 = vmul.f32 %v510, 1.442695
        %v533 = vpow.pop %v532
        %v534 = vmul.f32 %v511, 1.442695
        %v535 = vpow.pop %v534
        %v536 = vadd.f32 %v513, 1.0
        %v537 = vadd.f32 %v515, 1.0
        %v538 = vadd.f32 %v517, 1.0
        %v539 = vadd.f32 %v519, 1.0
        %v540 = vadd.f32 %v521, 1.0
        %v541 = vadd.f32 %v523, 1.0
        %v542 = vadd.f32 %v525, 1.0
        %v543 = vadd.f32 %v527, 1.0
        %v544 = vadd.f32 %v529, 1.0
        %v545 = vadd.f32 %v531, 1.0
        %v546 = vadd.f32 %v533, 1.0
        %v547 = vadd.f32 %v535, 1.0
        %v548 = vrcp.pop %v536
        %v549 = vmul.f32 1.0, %v548
        %v550 = vrcp.pop %v537
        %v551 = vmul.f32 1.0, %v550
        %v552 = vrcp.pop %v538
        %v553 = vmul.f32 1.0, %v552
        %v554 = vrcp.pop %v539
        %v555 = vmul.f32 1.0, %v554
        %v556 = vrcp.pop %v540
        %v557 = vmul.f32 1.0, %v556
        %v558 = vrcp.pop %v541
        %v559 = vmul.f32 1.0, %v558
        %v560 = vrcp.pop %v542
        %v561 = vmul.f32 1.0, %v560
        %v562 = vrcp.pop %v543
        %v563 = vmul.f32 1.0, %v562
        %v564 = vrcp.pop %v544
        %v565 = vmul.f32 1.0, %v564
        %v566 = vrcp.pop %v545
        %v567 = vmul.f32 1.0, %v566
        %v568 = vrcp.pop %v546
        %v569 = vmul.f32 1.0, %v568
        %v570 = vrcp.pop %v547
        %v571 = vmul.f32 1.0, %v570
        %v572 = vsub.f32 %v426, %v444
        %v573 = vsub.f32 %v427, %v445
        %v574 = vsub.f32 %v428, %v446
        %v575 = vsub.f32 %v429, %v447
        %v576 = vsub.f32 %v430, %v448
        %v577 = vsub.f32 %v431, %v449
        %v578 = vsub.f32 %v432, %v450
        %v579 = vsub.f32 %v433, %v451
        %v580 = vsub.f32 %v434, %v452
        %v581 = vsub.f32 %v435, %v453
        %v582 = vsub.f32 %v436, %v454
        %v583 = vsub.f32 %v437, %v455
        %v584 = vmul.f32 %v549, %v572
        %v585 = vmul.f32 %v551, %v573
        %v586 = vmul.f32 %v553, %v574
        %v587 = vmul.f32 %v555, %v575
        %v588 = vmul.f32 %v557, %v576
        %v589 = vmul.f32 %v559, %v577
        %v590 = vmul.f32 %v561, %v578
        %v591 = vmul.f32 %v563, %v579
        %v592 = vmul.f32 %v565, %v580
        %v593 = vmul.f32 %v567, %v581
        %v594 = vmul.f32 %v569, %v582
        %v595 = vmul.f32 %v571, %v583
        %v596 = vadd.f32 %v444, %v584
        %v597 = vadd.f32 %v445, %v585
        %v598 = vadd.f32 %v446, %v586
        %v599 = vadd.f32 %v447, %v587
        %v600 = vadd.f32 %v448, %v588
        %v601 = vadd.f32 %v449, %v589
        %v602 = vadd.f32 %v450, %v590
        %v603 = vadd.f32 %v451, %v591
        %v604 = vadd.f32 %v452, %v592
        %v605 = vadd.f32 %v453, %v593
        %v606 = vadd.f32 %v454, %v594
        %v607 = vadd.f32 %v455, %v595
        %608 = vst [vmem:[%s415] sm:$0xff] %v596
        %609 = vst [vmem:[%s415 + $0x8] sm:$0xff] %v597
        %610 = vst [vmem:[%s415 + $0x10] sm:$0xff] %v598
        %611 = vst [vmem:[%s415 + $0x18] sm:$0xff] %v599
        %612 = vst [vmem:[%s415 + $0x20] sm:$0xff] %v600
        %613 = vst [vmem:[%s415 + $0x28] sm:$0xff] %v601
        %614 = vst [vmem:[%s415 + $0x30] sm:$0xff] %v602
        %615 = vst [vmem:[%s415 + $0x38] sm:$0xff] %v603
        %616 = vst [vmem:[%s415 + $0x40] sm:$0xff] %v604
        %617 = vst [vmem:[%s415 + $0x48] sm:$0xff] %v605
        %618 = vst [vmem:[%s415 + $0x50] sm:$0xff] %v606
        %619 = vst [vmem:[%s415 + $0x58] sm:$0xff] %v607
        %v620 = vld [vmem:[#allocation8] sm:$0xff]
        %v621 = vld [vmem:[#allocation8 + $0x8] sm:$0xff]
        %v622 = vld [vmem:[#allocation8 + $0x10] sm:$0xff]
        %v623 = vld [vmem:[#allocation8 + $0x18] sm:$0xff]
        %v624 = vld [vmem:[#allocation8 + $0x20] sm:$0xff]
        %v625 = vld [vmem:[#allocation8 + $0x28] sm:$0xff]
        %v626 = vld [vmem:[#allocation8 + $0x30] sm:$0xff]
        %v627 = vld [vmem:[#allocation8 + $0x38] sm:$0xff]
        %v628 = vld [vmem:[#allocation8 + $0x40] sm:$0xff]
        %v629 = vld [vmem:[#allocation8 + $0x48] sm:$0xff]
        %v630 = vld [vmem:[#allocation8 + $0x50] sm:$0xff]
        %v631 = vld [vmem:[#allocation8 + $0x58] sm:$0xff]
        %v632 = vld [vmem:[#allocation8 + $0x60] sm:$0xff]
        %v633 = vld [vmem:[#allocation8 + $0x68] sm:$0xff]
        %v634 = vld [vmem:[#allocation8 + $0x70] sm:$0xff]
        %v635 = vld [vmem:[#allocation8 + $0x78] sm:$0xff]
        %v636 = vld [vmem:[#allocation8 + $0x80] sm:$0xff]
        %v637 = vld [vmem:[#allocation8 + $0x88] sm:$0xff]
        %v638 = vld [vmem:[#allocation8 + $0x90] sm:$0xff]
        %v639 = vld [vmem:[#allocation8 + $0x98] sm:$0xff]
        %v640 = vld [vmem:[#allocation8 + $0xa0] sm:$0xff]
        %v641 = vld [vmem:[#allocation8 + $0xa8] sm:$0xff]
        %v642 = vld [vmem:[#allocation8 + $0xb0] sm:$0xff]
        %v643 = vld [vmem:[#allocation8 + $0xb8] sm:$0xff]
        %v644 = vld [vmem:[#allocation8 + $0xc0] sm:$0xff]
        %v645 = vld [vmem:[#allocation8 + $0xc8] sm:$0xff]
        %v646 = vld [vmem:[#allocation8 + $0xd0] sm:$0xff]
        %v647 = vld [vmem:[#allocation8 + $0xd8] sm:$0xff]
        %v648 = vld [vmem:[#allocation8 + $0xe0] sm:$0xff]
        %v649 = vld [vmem:[#allocation8 + $0xe8] sm:$0xff]
        %v650 = vld [vmem:[#allocation8 + $0xf0] sm:$0xff]
        %v651 = vld [vmem:[#allocation8 + $0xf8] sm:$0xff]
        %v652 = vld [vmem:[#allocation8 + $0x100] sm:$0xff]
        %v653 = vld [vmem:[#allocation8 + $0x108] sm:$0xff]
        %v654 = vld [vmem:[#allocation8 + $0x110] sm:$0xff]
        %v655 = vld [vmem:[#allocation8 + $0x118] sm:$0xff]
        %v656 = vld [vmem:[#allocation8 + $0x120] sm:$0xff]
        %v657 = vld [vmem:[#allocation8 + $0x128] sm:$0xff]
        %v658 = vld [vmem:[#allocation8 + $0x130] sm:$0xff]
        %v659 = vld [vmem:[#allocation8 + $0x138] sm:$0xff]
        %v660 = vld [vmem:[#allocation8 + $0x140] sm:$0xff]
        %v661 = vld [vmem:[#allocation8 + $0x148] sm:$0xff]
        %v662 = vld [vmem:[#allocation8 + $0x150] sm:$0xff]
        %v663 = vld [vmem:[#allocation8 + $0x158] sm:$0xff]
        %v664 = vld [vmem:[#allocation8 + $0x160] sm:$0xff]
        %v665 = vld [vmem:[#allocation8 + $0x168] sm:$0xff]
        %v666 = vld [vmem:[#allocation8 + $0x170] sm:$0xff]
        %v667 = vld [vmem:[#allocation8 + $0x178] sm:$0xff]
        %v668 = vld [vmem:[#allocation8 + $0x180] sm:$0xff]
        %v669 = vld [vmem:[#allocation8 + $0x188] sm:$0xff]
        %v670 = vld [vmem:[#allocation8 + $0x190] sm:$0xff]
        %v671 = vld [vmem:[#allocation8 + $0x198] sm:$0xff]
        %v672 = vld [vmem:[#allocation8 + $0x1a0] sm:$0xff]
        %v673 = vld [vmem:[#allocation8 + $0x1a8] sm:$0xff]
        %v674 = vld [vmem:[#allocation8 + $0x1b0] sm:$0xff]
        %v675 = vld [vmem:[#allocation8 + $0x1b8] sm:$0xff]
        %v676 = vld [vmem:[#allocation8 + $0x1c0] sm:$0xff]
        %v677 = vld [vmem:[#allocation8 + $0x1c8] sm:$0xff]
        %v678 = vld [vmem:[#allocation8 + $0x1d0] sm:$0xff]
        %v679 = vld [vmem:[#allocation8 + $0x1d8] sm:$0xff]
        %v680 = vld [vmem:[#allocation8 + $0x1e0] sm:$0xff]
        %v681 = vld [vmem:[#allocation8 + $0x1e8] sm:$0xff]
        %v682 = vld [vmem:[#allocation8 + $0x1f0] sm:$0xff]
        %v683 = vld [vmem:[#allocation8 + $0x1f8] sm:$0xff]
        %v684 = vld [vmem:[#allocation8 + $0x200] sm:$0xff]
        %v685 = vld [vmem:[#allocation8 + $0x208] sm:$0xff]
        %v686 = vld [vmem:[#allocation8 + $0x210] sm:$0xff]
        %v687 = vld [vmem:[#allocation8 + $0x218] sm:$0xff]
        %v688 = vld [vmem:[#allocation8 + $0x220] sm:$0xff]
        %v689 = vld [vmem:[#allocation8 + $0x228] sm:$0xff]
        %v690 = vld [vmem:[#allocation8 + $0x230] sm:$0xff]
        %v691 = vld [vmem:[#allocation8 + $0x238] sm:$0xff]
        %v692 = vld [vmem:[#allocation8 + $0x240] sm:$0xff]
        %v693 = vld [vmem:[#allocation8 + $0x248] sm:$0xff]
        %v694 = vld [vmem:[#allocation8 + $0x250] sm:$0xff]
        %v695 = vld [vmem:[#allocation8 + $0x258] sm:$0xff]
        %v696 = vld [vmem:[#allocation8 + $0x260] sm:$0xff]
        %v697 = vld [vmem:[#allocation8 + $0x268] sm:$0xff]
        %v698 = vld [vmem:[#allocation8 + $0x270] sm:$0xff]
        %v699 = vld [vmem:[#allocation8 + $0x278] sm:$0xff]
        %v700 = vld [vmem:[#allocation8 + $0x280] sm:$0xff]
        %v701 = vld [vmem:[#allocation8 + $0x288] sm:$0xff]
        %v702 = vld [vmem:[#allocation8 + $0x290] sm:$0xff]
        %v703 = vld [vmem:[#allocation8 + $0x298] sm:$0xff]
        %v704 = vld [vmem:[#allocation8 + $0x2a0] sm:$0xff]
        %v705 = vld [vmem:[#allocation8 + $0x2a8] sm:$0xff]
        %v706 = vld [vmem:[#allocation8 + $0x2b0] sm:$0xff]
        %v707 = vld [vmem:[#allocation8 + $0x2b8] sm:$0xff]
        %v708 = vld [vmem:[#allocation8 + $0x2c0] sm:$0xff]
        %v709 = vld [vmem:[#allocation8 + $0x2c8] sm:$0xff]
        %v710 = vld [vmem:[#allocation8 + $0x2d0] sm:$0xff]
        %v711 = vld [vmem:[#allocation8 + $0x2d8] sm:$0xff]
        %v712 = vld [vmem:[#allocation8 + $0x2e0] sm:$0xff]
        %v713 = vld [vmem:[#allocation8 + $0x2e8] sm:$0xff]
        %v714 = vld [vmem:[#allocation8 + $0x2f0] sm:$0xff]
        %v715 = vld [vmem:[#allocation8 + $0x2f8] sm:$0xff]
        %v716 = vld [vmem:[%s4] sm:$0x1]
        %v718 = vlaneseq
        %v719 = vshrl.u32 %v718, 7
        %v720 = vsub.s32 0, %v719
        %v721 = vrot.slane %v716, %v720
        %723 = vmatprep.subr.mxu0 0.0
        %724 = vmatpush1.msra.mxu0 %v620
        %725 = vmatprep.subr.mxu0 0.0
        %726 = vmatpush1.msra.mxu0 %v621
        %727 = vmatprep.subr.mxu0 0.0
        %728 = vmatpush1.msra.mxu0 %v622
        %729 = vmatprep.subr.mxu0 0.0
        %730 = vmatpush1.msra.mxu0 %v623
        %731 = vmatprep.subr.mxu0 0.0
        %732 = vmatpush1.msra.mxu0 %v624
        %733 = vmatprep.subr.mxu0 0.0
        %734 = vmatpush1.msra.mxu0 %v625
        %735 = vmatprep.subr.mxu0 0.0
        %736 = vmatpush1.msra.mxu0 %v626
        %737 = vmatprep.subr.mxu0 0.0
        %738 = vmatpush1.msra.mxu0 %v627
        %739 = vmatprep.subr.mxu0 0.0
        %740 = vmatpush1.msra.mxu0 %v628
        %741 = vmatprep.subr.mxu0 0.0
        %742 = vmatpush1.msra.mxu0 %v629
        %743 = vmatprep.subr.mxu0 0.0
        %744 = vmatpush1.msra.mxu0 %v630
        %745 = vmatprep.subr.mxu0 0.0
        %746 = vmatpush1.msra.mxu0 %v631
        %747 = vmatprep.subr.mxu0 0.0
        %748 = vmatpush1.msra.mxu0 %v632
        %749 = vmatprep.subr.mxu0 0.0
        %750 = vmatpush1.msra.mxu0 %v633
        %751 = vmatprep.subr.mxu0 0.0
        %752 = vmatpush1.msra.mxu0 %v634
        %753 = vmatprep.subr.mxu0 0.0
        %754 = vmatpush1.msra.mxu0 %v635
        %755 = vmatprep.subr.mxu0 0.0
        %756 = vmatpush1.msra.mxu0 %v636
        %757 = vmatprep.subr.mxu0 0.0
        %758 = vmatpush1.msra.mxu0 %v637
        %759 = vmatprep.subr.mxu0 0.0
        %760 = vmatpush1.msra.mxu0 %v638
        %761 = vmatprep.subr.mxu0 0.0
        %762 = vmatpush1.msra.mxu0 %v639
        %763 = vmatprep.subr.mxu0 0.0
        %764 = vmatpush1.msra.mxu0 %v640
        %765 = vmatprep.subr.mxu0 0.0
        %766 = vmatpush1.msra.mxu0 %v641
        %767 = vmatprep.subr.mxu0 0.0
        %768 = vmatpush1.msra.mxu0 %v642
        %769 = vmatprep.subr.mxu0 0.0
        %770 = vmatpush1.msra.mxu0 %v643
        %771 = vmatprep.subr.mxu0 0.0
        %772 = vmatpush1.msra.mxu0 %v644
        %773 = vmatprep.subr.mxu0 0.0
        %774 = vmatpush1.msra.mxu0 %v645
        %775 = vmatprep.subr.mxu0 0.0
        %776 = vmatpush1.msra.mxu0 %v646
        %777 = vmatprep.subr.mxu0 0.0
        %778 = vmatpush1.msra.mxu0 %v647
        %779 = vmatprep.subr.mxu0 0.0
        %780 = vmatpush1.msra.mxu0 %v648
        %781 = vmatprep.subr.mxu0 0.0
        %782 = vmatpush1.msra.mxu0 %v649
        %783 = vmatprep.subr.mxu0 0.0
        %784 = vmatpush1.msra.mxu0 %v650
        %785 = vmatprep.subr.mxu0 0.0
        %786 = vmatpush1.msra.mxu0 %v651
        %787 = vmatprep.mubr.f32.mxu0 %v597
        %788 = vmatmul.mubr.f32.gmra.mrb[0].mxu0 %v596
        %v789 = vpop.f32.mrb[0].mxu0
        %v790 = vadd.f32 %v721, %v789
        %v791 = vpop.f32.mrb[0].mxu0
        %792 = vmatprep.mubr.f32.mxu0 %v603
        %793 = vmatmul.mubr.f32.gmra.mrb[0].mxu0 %v602
        %v794 = vpop.f32.mrb[0].mxu0
        %v795 = vadd.f32 %v721, %v794
        %v796 = vpop.f32.mrb[0].mxu0
        %797 = vdwg.mxu0
        %798 = vmatprep.subr.mxu0 0.0
        %799 = vmatpush1.msra.mxu0 %v652
        %800 = vmatprep.subr.mxu0 0.0
        %801 = vmatpush1.msra.mxu0 %v653
        %802 = vmatprep.subr.mxu0 0.0
        %803 = vmatpush1.msra.mxu0 %v654
        %804 = vmatprep.subr.mxu0 0.0
        %805 = vmatpush1.msra.mxu0 %v655
        %806 = vmatprep.subr.mxu0 0.0
        %807 = vmatpush1.msra.mxu0 %v656
        %808 = vmatprep.subr.mxu0 0.0
        %809 = vmatpush1.msra.mxu0 %v657
        %810 = vmatprep.subr.mxu0 0.0
        %811 = vmatpush1.msra.mxu0 %v658
        %812 = vmatprep.subr.mxu0 0.0
        %813 = vmatpush1.msra.mxu0 %v659
        %814 = vmatprep.subr.mxu0 0.0
        %815 = vmatpush1.msra.mxu0 %v660
        %816 = vmatprep.subr.mxu0 0.0
        %817 = vmatpush1.msra.mxu0 %v661
        %818 = vmatprep.subr.mxu0 0.0
        %819 = vmatpush1.msra.mxu0 %v662
        %820 = vmatprep.subr.mxu0 0.0
        %821 = vmatpush1.msra.mxu0 %v663
        %822 = vmatprep.subr.mxu0 0.0
        %823 = vmatpush1.msra.mxu0 %v664
        %824 = vmatprep.subr.mxu0 0.0
        %825 = vmatpush1.msra.mxu0 %v665
        %826 = vmatprep.subr.mxu0 0.0
        %827 = vmatpush1.msra.mxu0 %v666
        %828 = vmatprep.subr.mxu0 0.0
        %829 = vmatpush1.msra.mxu0 %v667
        %830 = vmatprep.subr.mxu0 0.0
        %831 = vmatpush1.msra.mxu0 %v668
        %832 = vmatprep.subr.mxu0 0.0
        %833 = vmatpush1.msra.mxu0 %v669
        %834 = vmatprep.subr.mxu0 0.0
        %835 = vmatpush1.msra.mxu0 %v670
        %836 = vmatprep.subr.mxu0 0.0
        %837 = vmatpush1.msra.mxu0 %v671
        %838 = vmatprep.subr.mxu0 0.0
        %839 = vmatpush1.msra.mxu0 %v672
        %840 = vmatprep.subr.mxu0 0.0
        %841 = vmatpush1.msra.mxu0 %v673
        %842 = vmatprep.subr.mxu0 0.0
        %843 = vmatpush1.msra.mxu0 %v674
        %844 = vmatprep.subr.mxu0 0.0
        %845 = vmatpush1.msra.mxu0 %v675
        %846 = vmatprep.subr.mxu0 0.0
        %847 = vmatpush1.msra.mxu0 %v676
        %848 = vmatprep.subr.mxu0 0.0
        %849 = vmatpush1.msra.mxu0 %v677
        %850 = vmatprep.subr.mxu0 0.0
        %851 = vmatpush1.msra.mxu0 %v678
        %852 = vmatprep.subr.mxu0 0.0
        %853 = vmatpush1.msra.mxu0 %v679
        %854 = vmatprep.subr.mxu0 0.0
        %855 = vmatpush1.msra.mxu0 %v680
        %856 = vmatprep.subr.mxu0 0.0
        %857 = vmatpush1.msra.mxu0 %v681
        %858 = vmatprep.subr.mxu0 0.0
        %859 = vmatpush1.msra.mxu0 %v682
        %860 = vmatprep.subr.mxu0 0.0
        %861 = vmatpush1.msra.mxu0 %v683
        %862 = vmatprep.mubr.f32.mxu0 %v599
        %863 = vmatmul.mubr.f32.gmra.mrb[0].mxu0 %v598
        %v864 = vpop.f32.mrb[0].mxu0
        %v865 = vadd.f32 %v790, %v864
        %v866 = vpop.f32.mrb[0].mxu0
        %867 = vmatprep.mubr.f32.mxu0 %v605
        %868 = vmatmul.mubr.f32.gmra.mrb[0].mxu0 %v604
        %v869 = vpop.f32.mrb[0].mxu0
        %v870 = vadd.f32 %v795, %v869
        %v871 = vpop.f32.mrb[0].mxu0
        %872 = vdwg.mxu0
        %873 = vmatprep.subr.mxu0 0.0
        %874 = vmatpush1.msra.mxu0 %v684
        %875 = vmatprep.subr.mxu0 0.0
        %876 = vmatpush1.msra.mxu0 %v685
        %877 = vmatprep.subr.mxu0 0.0
        %878 = vmatpush1.msra.mxu0 %v686
        %879 = vmatprep.subr.mxu0 0.0
        %880 = vmatpush1.msra.mxu0 %v687
        %881 = vmatprep.subr.mxu0 0.0
        %882 = vmatpush1.msra.mxu0 %v688
        %883 = vmatprep.subr.mxu0 0.0
        %884 = vmatpush1.msra.mxu0 %v689
        %885 = vmatprep.subr.mxu0 0.0
        %886 = vmatpush1.msra.mxu0 %v690
        %887 = vmatprep.subr.mxu0 0.0
        %888 = vmatpush1.msra.mxu0 %v691
        %889 = vmatprep.subr.mxu0 0.0
        %890 = vmatpush1.msra.mxu0 %v692
        %891 = vmatprep.subr.mxu0 0.0
        %892 = vmatpush1.msra.mxu0 %v693
        %893 = vmatprep.subr.mxu0 0.0
        %894 = vmatpush1.msra.mxu0 %v694
        %895 = vmatprep.subr.mxu0 0.0
        %896 = vmatpush1.msra.mxu0 %v695
        %897 = vmatprep.subr.mxu0 0.0
        %898 = vmatpush1.msra.mxu0 %v696
        %899 = vmatprep.subr.mxu0 0.0
        %900 = vmatpush1.msra.mxu0 %v697
        %901 = vmatprep.subr.mxu0 0.0
        %902 = vmatpush1.msra.mxu0 %v698
        %903 = vmatprep.subr.mxu0 0.0
        %904 = vmatpush1.msra.mxu0 %v699
        %905 = vmatprep.subr.mxu0 0.0
        %906 = vmatpush1.msra.mxu0 %v700
        %907 = vmatprep.subr.mxu0 0.0
        %908 = vmatpush1.msra.mxu0 %v701
        %909 = vmatprep.subr.mxu0 0.0
        %910 = vmatpush1.msra.mxu0 %v702
        %911 = vmatprep.subr.mxu0 0.0
        %912 = vmatpush1.msra.mxu0 %v703
        %913 = vmatprep.subr.mxu0 0.0
        %914 = vmatpush1.msra.mxu0 %v704
        %915 = vmatprep.subr.mxu0 0.0
        %916 = vmatpush1.msra.mxu0 %v705
        %917 = vmatprep.subr.mxu0 0.0
        %918 = vmatpush1.msra.mxu0 %v706
        %919 = vmatprep.subr.mxu0 0.0
        %920 = vmatpush1.msra.mxu0 %v707
        %921 = vmatprep.subr.mxu0 0.0
        %922 = vmatpush1.msra.mxu0 %v708
        %923 = vmatprep.subr.mxu0 0.0
        %924 = vmatpush1.msra.mxu0 %v709
        %925 = vmatprep.subr.mxu0 0.0
        %926 = vmatpush1.msra.mxu0 %v710
        %927 = vmatprep.subr.mxu0 0.0
        %928 = vmatpush1.msra.mxu0 %v711
        %929 = vmatprep.subr.mxu0 0.0
        %930 = vmatpush1.msra.mxu0 %v712
        %931 = vmatprep.subr.mxu0 0.0
        %932 = vmatpush1.msra.mxu0 %v713
        %933 = vmatprep.subr.mxu0 0.0
        %934 = vmatpush1.msra.mxu0 %v714
        %935 = vmatprep.subr.mxu0 0.0
        %936 = vmatpush1.msra.mxu0 %v715
        %937 = vmatprep.mubr.f32.mxu0 %v601
        %938 = vmatmul.mubr.f32.gmra.mrb[0].mxu0 %v600
        %v939 = vpop.f32.mrb[0].mxu0
        %v940 = vadd.f32 %v865, %v939
        %v941 = vpop.f32.mrb[0].mxu0
        %942 = vmatprep.mubr.f32.mxu0 %v607
        %943 = vmatmul.mubr.f32.gmra.mrb[0].mxu0 %v606
        %v944 = vpop.f32.mrb[0].mxu0
        %v945 = vadd.f32 %v870, %v944
        %v946 = vpop.f32.mrb[0].mxu0
        %947 = vdwg.mxu0
        %v948 = vmax.f32 %v940, 0.0
        %v949 = vmax.f32 %v945, 0.0
        %v950 = vld [vmem:[#allocation10] sm:$0xff]
        %v951 = vld [vmem:[#allocation10 + $0x8] sm:$0xff]
        %v952 = vld [vmem:[#allocation10 + $0x10] sm:$0xff]
        %v953 = vld [vmem:[#allocation10 + $0x18] sm:$0xff]
        %v954 = vld [vmem:[#allocation10 + $0x20] sm:$0xff]
        %v955 = vld [vmem:[#allocation10 + $0x28] sm:$0xff]
        %v956 = vld [vmem:[#allocation10 + $0x30] sm:$0xff]
        %v957 = vld [vmem:[#allocation10 + $0x38] sm:$0xff]
        %v958 = vld [vmem:[#allocation10 + $0x40] sm:$0xff]
        %v959 = vld [vmem:[#allocation10 + $0x48] sm:$0xff]
        %v960 = vld [vmem:[#allocation10 + $0x50] sm:$0xff]
        %v961 = vld [vmem:[#allocation10 + $0x58] sm:$0xff]
        %v962 = vld [vmem:[#allocation10 + $0x60] sm:$0xff]
        %v963 = vld [vmem:[#allocation10 + $0x68] sm:$0xff]
        %v964 = vld [vmem:[#allocation10 + $0x70] sm:$0xff]
        %v965 = vld [vmem:[#allocation10 + $0x78] sm:$0xff]
        %v966 = vld [vmem:[%s6] sm:$0x1]
        %v968 = vlaneseq
        %v969 = vshrl.u32 %v968, 7
        %v970 = vsub.s32 0, %v969
        %v971 = vrot.slane %v966, %v970
        %973 = vmatprep.subr.mxu0 0.0
        %974 = vmatpush1.msra.mxu0 %v950
        %975 = vmatprep.subr.mxu0 0.0
        %976 = vmatpush1.msra.mxu0 %v951
        %977 = vmatprep.subr.mxu0 0.0
        %978 = vmatpush1.msra.mxu0 %v952
        %979 = vmatprep.subr.mxu0 0.0
        %980 = vmatpush1.msra.mxu0 %v953
        %981 = vmatprep.subr.mxu0 0.0
        %982 = vmatpush1.msra.mxu0 %v954
        %983 = vmatprep.subr.mxu0 0.0
        %984 = vmatpush1.msra.mxu0 %v955
        %985 = vmatprep.subr.mxu0 0.0
        %986 = vmatpush1.msra.mxu0 %v956
        %987 = vmatprep.subr.mxu0 0.0
        %988 = vmatpush1.msra.mxu0 %v957
        %989 = vmatprep.subr.mxu0 0.0
        %990 = vmatpush1.msra.mxu0 %v958
        %991 = vmatprep.subr.mxu0 0.0
        %992 = vmatpush1.msra.mxu0 %v959
        %993 = vmatprep.subr.mxu0 0.0
        %994 = vmatpush1.msra.mxu0 %v960
        %995 = vmatprep.subr.mxu0 0.0
        %996 = vmatpush1.msra.mxu0 %v961
        %997 = vmatprep.subr.mxu0 0.0
        %998 = vmatpush1.msra.mxu0 %v962
        %999 = vmatprep.subr.mxu0 0.0
        %1000 = vmatpush1.msra.mxu0 %v963
        %1001 = vmatprep.subr.mxu0 0.0
        %1002 = vmatpush1.msra.mxu0 %v964
        %1003 = vmatprep.subr.mxu0 0.0
        %1004 = vmatpush1.msra.mxu0 %v965
        %1005 = vmatprep.subr.mxu0 0.0
        %1006 = vmatpush1.msra.mxu0 0.0
        %1007 = vmatprep.subr.mxu0 0.0
        %1008 = vmatpush1.msra.mxu0 0.0
        %1009 = vmatprep.subr.mxu0 0.0
        %1010 = vmatpush1.msra.mxu0 0.0
        %1011 = vmatprep.subr.mxu0 0.0
        %1012 = vmatpush1.msra.mxu0 0.0
        %1013 = vmatprep.subr.mxu0 0.0
        %1014 = vmatpush1.msra.mxu0 0.0
        %1015 = vmatprep.subr.mxu0 0.0
        %1016 = vmatpush1.msra.mxu0 0.0
        %1017 = vmatprep.subr.mxu0 0.0
        %1018 = vmatpush1.msra.mxu0 0.0
        %1019 = vmatprep.subr.mxu0 0.0
        %1020 = vmatpush1.msra.mxu0 0.0
        %1021 = vmatprep.subr.mxu0 0.0
        %1022 = vmatpush1.msra.mxu0 0.0
        %1023 = vmatprep.subr.mxu0 0.0
        %1024 = vmatpush1.msra.mxu0 0.0
        %1025 = vmatprep.subr.mxu0 0.0
        %1026 = vmatpush1.msra.mxu0 0.0
        %1027 = vmatprep.subr.mxu0 0.0
        %1028 = vmatpush1.msra.mxu0 0.0
        %1029 = vmatprep.subr.mxu0 0.0
        %1030 = vmatpush1.msra.mxu0 0.0
        %1031 = vmatprep.subr.mxu0 0.0
        %1032 = vmatpush1.msra.mxu0 0.0
        %1033 = vmatprep.subr.mxu0 0.0
        %1034 = vmatpush1.msra.mxu0 0.0
        %1035 = vmatprep.subr.mxu0 0.0
        %1036 = vmatpush1.msra.mxu0 0.0
        %1037 = vmatprep.mubr.f32.mxu0 0.0
        %1038 = vmatmul.mubr.f32.gmra.mrb[0].mxu0 %v948
        %v1039 = vpop.f32.mrb[0].mxu0
        %v1040 = vadd.f32 %v971, %v1039
        %v1041 = vpop.f32.mrb[0].mxu0
        %1042 = vmatprep.mubr.f32.mxu0 0.0
        %1043 = vmatmul.mubr.f32.gmra.mrb[0].mxu0 %v949
        %v1044 = vpop.f32.mrb[0].mxu0
        %v1045 = vadd.f32 %v971, %v1044
        %v1046 = vpop.f32.mrb[0].mxu0
        %1047 = vdwg.mxu0
        %1048 = vst [vmem:[%s408] sm:$0xff] %v1040
        %1049 = vst [vmem:[%s408 + $0x8] sm:$0xff] %v1045
        %s1050 = sand.u32 %s196, 1
        %s1051 = scalar_lea.sflag [#allocation4], %s1050
        %s1052 = sand.u32 %s196, 1
        %s1053 = smul.addr %s1052, 16
        %s1054 = scalar_lea.vmem [#allocation11], %s1053
        %s1055 = sand.u32 %s222, 1
        %s1056 = scalar_lea.sflag [#allocation13], %s1055
        %s1057 = sand.u32 %s222, 1
        %s1058 = smul.addr %s1057, 96
        %s1059 = scalar_lea.vmem [#allocation12], %s1058
        // Predicated region
        $region69: #{tpu_custom_call.1} parent=47 // pred_check
          %p1060 = pneg %p206
        $region70: #{tpu_custom_call.1} parent=47 // pred_check_branch
          %1062 = sbr.rel (%p1060) target = $region72
        $region71: #{tpu_custom_call.1} parent=47 // pred_region
          %s1063 = smul.u32 2, %s31
          %s1065 = ssub.s32 256, 256
          %1066 = vsyncadd %s1051, %s1065
          %s1067 = smul.addr %s1063, 128
          %s1068 = scalar_lea.hbm %s7, %s1067
          %s1069 = sshll.u32 %s1054, 4
          %s1070 = int_to_ptr.vmem [resolvable:$true] %s1069
          %1075 = dma.vmem_to_hbm [thread:$0]  %s1070, 256, %s1068, %s1051, 128, 128, 8
        $region72: #{tpu_custom_call.1} parent=47 // pred_fallthru
          _
        // Predicated region
        $region73: #{tpu_custom_call.1} parent=47 // pred_check
          %p1076 = pneg %p232
        $region74: #{tpu_custom_call.1} parent=47 // pred_check_branch
          %1078 = sbr.rel (%p1076) target = $region76
        $region75: #{tpu_custom_call.1} parent=47 // pred_region
          %s1079 = smul.u32 2, %s31
          %s1081 = ssub.s32 1536, 1536
          %1082 = vsyncadd %s1056, %s1081
          %s1083 = smul.addr %s1079, 6
          %s1084 = smul.addr %s1083, 128
          %s1085 = scalar_lea.hbm %s8, %s1084
          %s1086 = sshll.u32 %s1059, 4
          %s1087 = int_to_ptr.vmem [resolvable:$true] %s1086
          %1092 = dma.vmem_to_hbm [thread:$0]  %s1087, 1536, %s1085, %s1056, 768, 768, 48
        $region76: #{tpu_custom_call.1} parent=47 // pred_fallthru
          _
      $region48: #{tpu_custom_call.1} parent=5 // pred_fallthru
        _
      %p1093 = scmp.le.s32.totalorder 2, %s26
      // Predicated region
      $region77: #{tpu_custom_call.1} parent=5 // pred_check
        %p1094 = pneg %p1093
      $region78: #{tpu_custom_call.1} parent=5 // pred_check_branch
        %1096 = sbr.rel (%p1094) target = $region80
      $region79: #{tpu_custom_call.1} parent=5 // pred_region
        %s1097 = ssub.s32 %s26, 2
        // Predicated region
        $region81: #{tpu_custom_call.1} parent=79 // pred_check
          %p1098 = pneg %p212
        $region82: #{tpu_custom_call.1} parent=79 // pred_check_branch
          %1100 = sbr.rel (%p1098) target = $region84
        $region83: #{tpu_custom_call.1} parent=79 // pred_region
          %s1101 = sand.u32 %s197, 1
          %s1102 = scalar_lea.sflag [#allocation4], %s1101
          %s1103 = sand.u32 %s197, 1
          %s1104 = smul.addr %s1103, 16
          %s1105 = scalar_lea.vmem [#allocation11], %s1104
          %1106 = dma.done %s1102, 256
        $region84: #{tpu_custom_call.1} parent=79 // pred_fallthru
          _
        // Predicated region
        $region85: #{tpu_custom_call.1} parent=79 // pred_check
          %p1107 = pneg %p238
        $region86: #{tpu_custom_call.1} parent=79 // pred_check_branch
          %1109 = sbr.rel (%p1107) target = $region88
        $region87: #{tpu_custom_call.1} parent=79 // pred_region
          %s1110 = sand.u32 %s223, 1
          %s1111 = scalar_lea.sflag [#allocation13], %s1110
          %s1112 = sand.u32 %s223, 1
          %s1113 = smul.addr %s1112, 96
          %s1114 = scalar_lea.vmem [#allocation12], %s1113
          %1115 = dma.done %s1111, 1536
        $region88: #{tpu_custom_call.1} parent=79 // pred_fallthru
          _
      $region80: #{tpu_custom_call.1} parent=5 // pred_fallthru
        _
    $region6: #{tpu_custom_call.1} parent=1 // loop_footer
      %s30 = sadd.s32 1, %s26
    $region7: #{tpu_custom_call.1} parent=1 // loop_footer_branch
      %25 = sbr.rel target = $region3
    $region8: #{tpu_custom_call.1} parent=1 // loop_exit
      _
    %1116 = vsyncpa [#allocation3], 1
    %s1117 = scalar_lea.sflag [#allocation3], 1
    %1118 = vsyncpa %s1117, 1
    %1119 = vsyncpa [#allocation6], 1
    %s1120 = scalar_lea.sflag [#allocation6], 1
    %1121 = vsyncpa %s1120, 1
    %1122 = vsyncpa [#allocation9], 1
    %1123 = vsyncpa [#allocation4], 1
    %s1124 = scalar_lea.sflag [#allocation4], 1
    %1125 = vsyncpa %s1124, 1
    %1126 = vsyncpa [#allocation13], 1
    %s1127 = scalar_lea.sflag [#allocation13], 1
    %1128 = vsyncpa %s1127, 1

// kernel: tpu_custom_call.1
$region0: #{tpu_custom_call.1}
  #allocation0 [shape = 'u32[]', space=smem, size = 0x4, offset = 0x4, fixed_abs, tag = 'smem constant byte address 0x4 - core index']
  #allocation1 [shape = 'u32[144,128]{1,0:T(1,128)}', space=vmem, size = 0x12000, scoped, tag = 'internal scratch']
  %s0 = inlined_call_operand.hbm [shape: f32[1,768], index: 0, kind: input, shape index: {}]
  %s1 = inlined_call_operand.hbm [shape: bf16[32,768], index: 1, kind: input, shape index: {}]
  %s2 = inlined_call_operand.hbm [shape: bf16[32,768], index: 2, kind: input, shape index: {}]
  %s3 = inlined_call_operand.hbm [shape: f32[768,128], index: 3, kind: input, shape index: {}]
  %s4 = inlined_call_operand.vmem [shape: f32[1,128], index: 4, kind: input, shape index: {}]
  %s5 = inlined_call_operand.hbm [shape: f32[128,128], index: 5, kind: input, shape index: {}]
  %s6 = inlined_call_operand.vmem [shape: f32[1,128], index: 6, kind: input, shape index: {}]
  %s7 = inlined_call_operand.hbm [shape: f32[32,128], index: 7, kind: output, shape index: {0}]
  %s8 = inlined_call_operand.hbm [shape: f32[32,768], index: 8, kind: output, shape index: {1}]
  %9 = xla_tuple %s7, %s8
  %s10 = sld [smem:[#allocation0]]
  $region89: #{tpu_custom_call.1} parent=0
    _
  %s12 = ssub.s32 1, %s10
  %s13 = scalar_select 0, %s12, %s10
  $region1: #{tpu_custom_call.1} parent=0
    #allocation2 [shape = 'u8[3072]{0}', space=vmem, size = 0xc00, scoped, tag = 'input window, operand 0, single buffered']
    #allocation3 [shape = 's32[2]{0}', space=sflag, size = 0x8, scoped, tag = 'scoped memory for tpu_custom_call.1']
    #allocation4 [shape = 's32[2]{0}', space=sflag, size = 0x8, scoped, tag = 'scoped memory for tpu_custom_call.1']
    #allocation5 [shape = 'u8[49152]{0}', space=vmem, size = 0xc000, scoped, tag = 'input window, operand 1']
    #allocation6 [shape = 's32[2]{0}', space=sflag, size = 0x8, scoped, tag = 'scoped memory for tpu_custom_call.1']
    #allocation7 [shape = 'u8[49152]{0}', space=vmem, size = 0xc000, scoped, tag = 'input window, operand 2']
    #allocation8 [shape = 'u8[393216]{0}', space=vmem, size = 0x60000, scoped, tag = 'input window, operand 3, single buffered']
    #allocation9 [shape = 's32[1]{0}', space=sflag, size = 0x4, scoped, tag = 'scoped memory for tpu_custom_call.1']
    #allocation10 [shape = 'u8[65536]{0}', space=vmem, size = 0x10000, scoped, tag = 'input window, operand 5, single buffered']
    #allocation11 [shape = 'u8[16384]{0}', space=vmem, size = 0x4000, scoped, tag = 'output window, operand 0']
    #allocation12 [shape = 'u8[98304]{0}', space=vmem, size = 0x18000, scoped, tag = 'output window, operand 1']
    #allocation13 [shape = 's32[2]{0}', space=sflag, size = 0x8, scoped, tag = 'scoped memory for tpu_custom_call.1']
    %14 = vsyncpa [#allocation3], 0
    %15 = vsyncpa [#allocation6], 0
    %s16 = scalar_lea.sflag [#allocation6], 1
    %17 = vsyncpa %s16, 0
    %18 = vsyncpa [#allocation9], 0
    %19 = vsyncpa [#allocation4], 0
    %s20 = scalar_lea.sflag [#allocation4], 1
    %21 = vsyncpa %s20, 0
    %22 = vsyncpa [#allocation13], 0
    %s23 = scalar_lea.sflag [#allocation13], 1
    %24 = vsyncpa %s23, 0
    loop: start=0, step=1, limit=4
    $region2: #{tpu_custom_call.1} parent=1 // loop_pre_header
      _
    $region3: #{tpu_custom_call.1} parent=1 // loop_header
      %s26 = sphi 0, %s30
      %p27 = scmp.ge.s32.totalorder %s26, 4
      %s34 = sphi 0, %s34
      %s36 = sphi 0, %s34
      %s37 = sphi 0, %s36
      %s51 = sphi 0, %s37
      %s57 = sphi 0, %s59
      %s60 = sphi 0, %s57
      %s61 = sphi 0, %s60
      %s77 = sphi 0, %s61
      %s83 = sphi 0, %s85
      %s86 = sphi 0, %s83
      %s87 = sphi 0, %s86
      %s103 = sphi 0, %s87
      %s107 = sphi 0, %s107
      %s109 = sphi 0, %s107
      %s110 = sphi 0, %s109
      %s124 = sphi 0, %s110
      %s128 = sphi 0, %s128
      %s130 = sphi 0, %s128
      %s131 = sphi 0, %s130
      %s145 = sphi 0, %s131
      %s149 = sphi 0, %s149
      %s151 = sphi 0, %s149
      %s152 = sphi 0, %s151
      %s166 = sphi 0, %s152
      %s170 = sphi 0, %s170
      %s172 = sphi 0, %s170
      %s173 = sphi 0, %s172
      %s187 = sphi 0, %s173
      %s193 = sphi 0, %s195
      %s196 = sphi 0, %s193
      %s197 = sphi 0, %s196
      %s213 = sphi 0, %s197
      %s219 = sphi 0, %s221
      %s222 = sphi 0, %s219
      %s223 = sphi 0, %s222
      %s239 = sphi 0, %s223
    $region4: #{tpu_custom_call.1} parent=1 // loop_header_branch
      %29 = sbr.rel (%p27) target = $region8
    $region5: #{tpu_custom_call.1} parent=1 // loop_body
      %s31 = ssub.s32 %s26, 1
      %s32 = ssub.s32 %s26, 2
      %s33 = sadd.s32 %s26, 1
      %s35 = sadd.s32 %s34, 1
      %p38 = scmp.eq.s32.totalorder %s26, 1
      %p39 = scmp.ne.s32.totalorder %s34, %s36
      %p40 = scmp.eq.s32.totalorder %s26, 0
      %p41 = por %p39, %p40
      %p42 = scmp.ne.s32.totalorder %s34, %s36
      %p43 = scmp.eq.s32.totalorder %s31, 1
      %p44 = por %p42, %p43
      %p45 = scmp.ne.s32.totalorder %s36, %s37
      %p46 = scmp.eq.s32.totalorder %s31, 0
      %p47 = por %p45, %p46
      %p48 = scmp.ne.s32.totalorder %s36, %s37
      %p49 = scmp.eq.s32.totalorder %s32, 1
      %p50 = por %p48, %p49
      %p52 = scmp.ne.s32.totalorder %s37, %s51
      %p53 = scmp.eq.s32.totalorder %s32, 0
      %p54 = por %p52, %p53
      %s55 = ssub.s32 %s26, %s33
      %p56 = scmp.eq.s32.totalorder %s55, 0
      %s58 = sadd.s32 %s57, 1
      %s59 = scalar_select %p56, %s57, %s58
      %p62 = pneg %p56
      %p63 = scmp.eq.s32.totalorder %s26, 1
      %p64 = por %p62, %p63
      %p65 = scmp.ne.s32.totalorder %s57, %s60
      %p66 = scmp.eq.s32.totalorder %s26, 0
      %p67 = por %p65, %p66
      %p68 = scmp.ne.s32.totalorder %s57, %s60
      %p69 = scmp.eq.s32.totalorder %s31, 1
      %p70 = por %p68, %p69
      %p71 = scmp.ne.s32.totalorder %s60, %s61
      %p72 = scmp.eq.s32.totalorder %s31, 0
      %p73 = por %p71, %p72
      %p74 = scmp.ne.s32.totalorder %s60, %s61
      %p75 = scmp.eq.s32.totalorder %s32, 1
      %p76 = por %p74, %p75
      %p78 = scmp.ne.s32.totalorder %s61, %s77
      %p79 = scmp.eq.s32.totalorder %s32, 0
      %p80 = por %p78, %p79
      %s81 = ssub.s32 %s26, %s33
      %p82 = scmp.eq.s32.totalorder %s81, 0
      %s84 = sadd.s32 %s83, 1
      %s85 = scalar_select %p82, %s83, %s84
      %p88 = pneg %p82
      %p89 = scmp.eq.s32.totalorder %s26, 1
      %p90 = por %p88, %p89
      %p91 = scmp.ne.s32.totalorder %s83, %s86
      %p92 = scmp.eq.s32.totalorder %s26, 0
      %p93 = por %p91, %p92
      %p94 = scmp.ne.s32.totalorder %s83, %s86
      %p95 = scmp.eq.s32.totalorder %s31, 1
      %p96 = por %p94, %p95
      %p97 = scmp.ne.s32.totalorder %s86, %s87
      %p98 = scmp.eq.s32.totalorder %s31, 0
      %p99 = por %p97, %p98
      %p100 = scmp.ne.s32.totalorder %s86, %s87
      %p101 = scmp.eq.s32.totalorder %s32, 1
      %p102 = por %p100, %p101
      %p104 = scmp.ne.s32.totalorder %s87, %s103
      %p105 = scmp.eq.s32.totalorder %s32, 0
      %p106 = por %p104, %p105
      %s108 = sadd.s32 %s107, 1
      %p111 = scmp.eq.s32.totalorder %s26, 1
      %p112 = scmp.ne.s32.totalorder %s107, %s109
      %p113 = scmp.eq.s32.totalorder %s26, 0
      %p114 = por %p112, %p113
      %p115 = scmp.ne.s32.totalorder %s107, %s109
      %p116 = scmp.eq.s32.totalorder %s31, 1
      %p117 = por %p115, %p116
      %p118 = scmp.ne.s32.totalorder %s109, %s110
      %p119 = scmp.eq.s32.totalorder %s31, 0
      %p120 = por %p118, %p119
      %p121 = scmp.ne.s32.totalorder %s109, %s110
      %p122 = scmp.eq.s32.totalorder %s32, 1
      %p123 = por %p121, %p122
      %p125 = scmp.ne.s32.totalorder %s110, %s124
      %p126 = scmp.eq.s32.totalorder %s32, 0
      %p127 = por %p125, %p126
      %s129 = sadd.s32 %s128, 1
      %p132 = scmp.eq.s32.totalorder %s26, 1
      %p133 = scmp.ne.s32.totalorder %s128, %s130
      %p134 = scmp.eq.s32.totalorder %s26, 0
      %p135 = por %p133, %p134
      %p136 = scmp.ne.s32.totalorder %s128, %s130
      %p137 = scmp.eq.s32.totalorder %s31, 1
      %p138 = por %p136, %p137
      %p139 = scmp.ne.s32.totalorder %s130, %s131
      %p140 = scmp.eq.s32.totalorder %s31, 0
      %p141 = por %p139, %p140
      %p142 = scmp.ne.s32.totalorder %s130, %s131
      %p143 = scmp.eq.s32.totalorder %s32, 1
      %p144 = por %p142, %p143
      %p146 = scmp.ne.s32.totalorder %s131, %s145
      %p147 = scmp.eq.s32.totalorder %s32, 0
      %p148 = por %p146, %p147
      %s150 = sadd.s32 %s149, 1
      %p153 = scmp.eq.s32.totalorder %s26, 1
      %p154 = scmp.ne.s32.totalorder %s149, %s151
      %p155 = scmp.eq.s32.totalorder %s26, 0
      %p156 = por %p154, %p155
      %p157 = scmp.ne.s32.totalorder %s149, %s151
      %p158 = scmp.eq.s32.totalorder %s31, 1
      %p159 = por %p157, %p158
      %p160 = scmp.ne.s32.totalorder %s151, %s152
      %p161 = scmp.eq.s32.totalorder %s31, 0
      %p162 = por %p160, %p161
      %p163 = scmp.ne.s32.totalorder %s151, %s152
      %p164 = scmp.eq.s32.totalorder %s32, 1
      %p165 = por %p163, %p164
      %p167 = scmp.ne.s32.totalorder %s152, %s166
      %p168 = scmp.eq.s32.totalorder %s32, 0
      %p169 = por %p167, %p168
      %s171 = sadd.s32 %s170, 1
      %p174 = scmp.eq.s32.totalorder %s26, 1
      %p175 = scmp.ne.s32.totalorder %s170, %s172
      %p176 = scmp.eq.s32.totalorder %s26, 0
      %p177 = por %p175, %p176
      %p178 = scmp.ne.s32.totalorder %s170, %s172
      %p179 = scmp.eq.s32.totalorder %s31, 1
      %p180 = por %p178, %p179
      %p181 = scmp.ne.s32.totalorder %s172, %s173
      %p182 = scmp.eq.s32.totalorder %s31, 0
      %p183 = por %p181, %p182
      %p184 = scmp.ne.s32.totalorder %s172, %s173
      %p185 = scmp.eq.s32.totalorder %s32, 1
      %p186 = por %p184, %p185
      %p188 = scmp.ne.s32.totalorder %s173, %s187
      %p189 = scmp.eq.s32.totalorder %s32, 0
      %p190 = por %p188, %p189
      %s191 = ssub.s32 %s26, %s33
      %p192 = scmp.eq.s32.totalorder %s191, 0
      %s194 = sadd.s32 %s193, 1
      %s195 = scalar_select %p192, %s193, %s194
      %p198 = pneg %p192
      %p199 = scmp.eq.s32.totalorder %s26, 1
      %p200 = por %p198, %p199
      %p201 = scmp.ne.s32.totalorder %s193, %s196
      %p202 = scmp.eq.s32.totalorder %s26, 0
      %p203 = por %p201, %p202
      %p204 = scmp.ne.s32.totalorder %s193, %s196
      %p205 = scmp.eq.s32.totalorder %s31, 1
      %p206 = por %p204, %p205
      %p207 = scmp.ne.s32.totalorder %s196, %s197
      %p208 = scmp.eq.s32.totalorder %s31, 0
      %p209 = por %p207, %p208
      %p210 = scmp.ne.s32.totalorder %s196, %s197
      %p211 = scmp.eq.s32.totalorder %s32, 1
      %p212 = por %p210, %p211
      %p214 = scmp.ne.s32.totalorder %s197, %s213
      %p215 = scmp.eq.s32.totalorder %s32, 0
      %p216 = por %p214, %p215
      %s217 = ssub.s32 %s26, %s33
      %p218 = scmp.eq.s32.totalorder %s217, 0
      %s220 = sadd.s32 %s219, 1
      %s221 = scalar_select %p218, %s219, %s220
      %p224 = pneg %p218
      %p225 = scmp.eq.s32.totalorder %s26, 1
      %p226 = por %p224, %p225
      %p227 = scmp.ne.s32.totalorder %s219, %s222
      %p228 = scmp.eq.s32.totalorder %s26, 0
      %p229 = por %p227, %p228
      %p230 = scmp.ne.s32.totalorder %s219, %s222
      %p231 = scmp.eq.s32.totalorder %s31, 1
      %p232 = por %p230, %p231
      %p233 = scmp.ne.s32.totalorder %s222, %s223
      %p234 = scmp.eq.s32.totalorder %s31, 0
      %p235 = por %p233, %p234
      %p236 = scmp.ne.s32.totalorder %s222, %s223
      %p237 = scmp.eq.s32.totalorder %s32, 1
      %p238 = por %p236, %p237
      %p240 = scmp.ne.s32.totalorder %s223, %s239
      %p241 = scmp.eq.s32.totalorder %s32, 0
      %p242 = por %p240, %p241
      %p243 = scmp.le.s32.totalorder 1, %s26
      %p244 = scmp.lt.s32.totalorder %s26, 3
      %p245 = pnand %p243, %p244
      %p246 = pneg %p245
      // Predicated region
      $region9: #{tpu_custom_call.1} parent=5 // pred_check
        _
      $region10: #{tpu_custom_call.1} parent=5 // pred_check_branch
        %248 = sbr.rel (%p245) target = $region12
      $region11: #{tpu_custom_call.1} parent=5 // pred_region
        %s249 = ssub.s32 %s26, 1
        // Predicated region
        $region13: #{tpu_custom_call.1} parent=11 // pred_check
          %p250 = pneg %p47
        $region14: #{tpu_custom_call.1} parent=11 // pred_check_branch
          %252 = sbr.rel (%p250) target = $region16
        $region15: #{tpu_custom_call.1} parent=11 // pred_region
          %s254 = ssub.s32 96, 96
          %255 = vsyncadd [#allocation3], %s254
          %s257 = sshll.u32 [#allocation2], 4
          %s258 = int_to_ptr.vmem [resolvable:$true] %s257
          %260 = dma.hbm_to_vmem [thread:$0]  %s0, 96, %s258, [#allocation3]
        $region16: #{tpu_custom_call.1} parent=11 // pred_fallthru
          _
        // Predicated region
        $region17: #{tpu_custom_call.1} parent=11 // pred_check
          %p261 = pneg %p120
        $region18: #{tpu_custom_call.1} parent=11 // pred_check_branch
          %263 = sbr.rel (%p261) target = $region20
        $region19: #{tpu_custom_call.1} parent=11 // pred_region
          %s265 = ssub.s32 12288, 12288
          %266 = vsyncadd [#allocation9], %s265
          %s267 = sshll.u32 [#allocation8], 4
          %s268 = int_to_ptr.vmem [resolvable:$true] %s267
          %273 = dma.hbm_to_vmem [thread:$0]  %s3, 12288, %s268, [#allocation9], 128, 128, 8
        $region20: #{tpu_custom_call.1} parent=11 // pred_fallthru
          _
        // Predicated region
        $region21: #{tpu_custom_call.1} parent=11 // pred_check
          %p274 = pneg %p141
        $region22: #{tpu_custom_call.1} parent=11 // pred_check_branch
          %276 = sbr.rel (%p274) target = $region24
        $region23: #{tpu_custom_call.1} parent=11 // pred_region
          _
        $region24: #{tpu_custom_call.1} parent=11 // pred_fallthru
          _
        // Predicated region
        $region25: #{tpu_custom_call.1} parent=11 // pred_check
          %p277 = pneg %p162
        $region26: #{tpu_custom_call.1} parent=11 // pred_check_branch
          %279 = sbr.rel (%p277) target = $region28
        $region27: #{tpu_custom_call.1} parent=11 // pred_region
          %s281 = ssub.s32 2048, 2048
          %282 = vsyncadd [#allocation9], %s281
          %s283 = sshll.u32 [#allocation10], 4
          %s284 = int_to_ptr.vmem [resolvable:$true] %s283
          %289 = dma.hbm_to_vmem [thread:$0]  %s5, 2048, %s284, [#allocation9], 128, 128, 8
        $region28: #{tpu_custom_call.1} parent=11 // pred_fallthru
          _
        // Predicated region
        $region29: #{tpu_custom_call.1} parent=11 // pred_check
          %p290 = pneg %p183
        $region30: #{tpu_custom_call.1} parent=11 // pred_check_branch
          %292 = sbr.rel (%p290) target = $region32
        $region31: #{tpu_custom_call.1} parent=11 // pred_region
          _
        $region32: #{tpu_custom_call.1} parent=11 // pred_fallthru
          _
      $region12: #{tpu_custom_call.1} parent=5 // pred_fallthru
        _
      %p293 = scmp.lt.s32.totalorder %s26, 2
      // Predicated region
      $region33: #{tpu_custom_call.1} parent=5 // pred_check
        %p294 = pneg %p293
      $region34: #{tpu_custom_call.1} parent=5 // pred_check_branch
        %296 = sbr.rel (%p294) target = $region36
      $region35: #{tpu_custom_call.1} parent=5 // pred_region
        // Predicated region
        $region37: #{tpu_custom_call.1} parent=35 // pred_check
          %p297 = pneg %p67
        $region38: #{tpu_custom_call.1} parent=35 // pred_check_branch
          %299 = sbr.rel (%p297) target = $region40
        $region39: #{tpu_custom_call.1} parent=35 // pred_region
          %s300 = sand.u32 %s26, 1
          %s301 = scalar_lea.sflag [#allocation6], %s300
          %s302 = sand.u32 %s57, 1
          %s303 = smul.addr %s302, 48
          %s304 = scalar_lea.vmem [#allocation5], %s303
          %s305 = smul.u32 2, %s26
          %s307 = ssub.s32 768, 768
          %308 = vsyncadd %s301, %s307
          %s309 = smul.addr %s305, 6
          %s310 = smul.addr %s309, 64
          %s311 = scalar_lea.hbm %s1, %s310
          %s312 = sshll.u32 %s304, 4
          %s313 = int_to_ptr.vmem [resolvable:$true] %s312
          %318 = dma.hbm_to_vmem [thread:$0]  %s311, 768, %s313, %s301, 384, 384, 24
        $region40: #{tpu_custom_call.1} parent=35 // pred_fallthru
          _
        // Predicated region
        $region41: #{tpu_custom_call.1} parent=35 // pred_check
          %p319 = pneg %p93
        $region42: #{tpu_custom_call.1} parent=35 // pred_check_branch
          %321 = sbr.rel (%p319) target = $region44
        $region43: #{tpu_custom_call.1} parent=35 // pred_region
          %s322 = sand.u32 %s26, 1
          %s323 = scalar_lea.sflag [#allocation6], %s322
          %s324 = sand.u32 %s83, 1
          %s325 = smul.addr %s324, 48
          %s326 = scalar_lea.vmem [#allocation7], %s325
          %s327 = smul.u32 2, %s26
          %s329 = ssub.s32 768, 768
          %330 = vsyncadd %s323, %s329
          %s331 = smul.addr %s327, 6
          %s332 = smul.addr %s331, 64
          %s333 = scalar_lea.hbm %s2, %s332
          %s334 = sshll.u32 %s326, 4
          %s335 = int_to_ptr.vmem [resolvable:$true] %s334
          %340 = dma.hbm_to_vmem [thread:$0]  %s333, 768, %s335, %s323, 384, 384, 24
        $region44: #{tpu_custom_call.1} parent=35 // pred_fallthru
          _
      $region36: #{tpu_custom_call.1} parent=5 // pred_fallthru
        _
      %p341 = scmp.le.s32.totalorder 1, %s26
      %p342 = scmp.lt.s32.totalorder %s26, 3
      %p343 = pnand %p341, %p342
      %p344 = pneg %p343
      // Predicated region
      $region45: #{tpu_custom_call.1} parent=5 // pred_check
        _
      $region46: #{tpu_custom_call.1} parent=5 // pred_check_branch
        %346 = sbr.rel (%p343) target = $region48
      $region47: #{tpu_custom_call.1} parent=5 // pred_region
        %s347 = ssub.s32 %s26, 1
        // Predicated region
        $region49: #{tpu_custom_call.1} parent=47 // pred_check
          %p348 = pneg %p47
        $region50: #{tpu_custom_call.1} parent=47 // pred_check_branch
          %350 = sbr.rel (%p348) target = $region52
        $region51: #{tpu_custom_call.1} parent=47 // pred_region
          %351 = dma.done [#allocation3], 96
        $region52: #{tpu_custom_call.1} parent=47 // pred_fallthru
          _
        %s352 = sand.u32 %s31, 1
        %s353 = scalar_lea.sflag [#allocation6], %s352
        %s354 = sand.u32 %s60, 1
        %s355 = smul.addr %s354, 48
        %s356 = scalar_lea.vmem [#allocation5], %s355
        // Predicated region
        $region53: #{tpu_custom_call.1} parent=47 // pred_check
          %p357 = pneg %p73
        $region54: #{tpu_custom_call.1} parent=47 // pred_check_branch
          %359 = sbr.rel (%p357) target = $region56
        $region55: #{tpu_custom_call.1} parent=47 // pred_region
          %360 = dma.done %s353, 768
        $region56: #{tpu_custom_call.1} parent=47 // pred_fallthru
          _
        %s361 = sand.u32 %s31, 1
        %s362 = scalar_lea.sflag [#allocation6], %s361
        %s363 = sand.u32 %s86, 1
        %s364 = smul.addr %s363, 48
        %s365 = scalar_lea.vmem [#allocation7], %s364
        // Predicated region
        $region57: #{tpu_custom_call.1} parent=47 // pred_check
          %p366 = pneg %p99
        $region58: #{tpu_custom_call.1} parent=47 // pred_check_branch
          %368 = sbr.rel (%p366) target = $region60
        $region59: #{tpu_custom_call.1} parent=47 // pred_region
          %369 = dma.done %s362, 768
        $region60: #{tpu_custom_call.1} parent=47 // pred_fallthru
          _
        // Predicated region
        $region61: #{tpu_custom_call.1} parent=47 // pred_check
          %p370 = pneg %p120
        $region62: #{tpu_custom_call.1} parent=47 // pred_check_branch
          %372 = sbr.rel (%p370) target = $region64
        $region63: #{tpu_custom_call.1} parent=47 // pred_region
          %373 = dma.done [#allocation9], 12288
        $region64: #{tpu_custom_call.1} parent=47 // pred_fallthru
          _
        // Predicated region
        $region65: #{tpu_custom_call.1} parent=47 // pred_check
          %p374 = pneg %p162
        $region66: #{tpu_custom_call.1} parent=47 // pred_check_branch
          %376 = sbr.rel (%p374) target = $region68
        $region67: #{tpu_custom_call.1} parent=47 // pred_region
          %377 = dma.done [#allocation9], 2048
        $region68: #{tpu_custom_call.1} parent=47 // pred_fallthru
          _
        %p378 = pneg %p47
        %p379 = pneg %p44
        %s380 = sand.u32 %s31, 1
        %s381 = scalar_lea.sflag [#allocation6], %s380
        %s382 = sand.u32 %s60, 1
        %s383 = smul.addr %s382, 48
        %s384 = scalar_lea.vmem [#allocation5], %s383
        %p385 = pneg %p73
        %p386 = pneg %p70
        %s387 = sand.u32 %s31, 1
        %s388 = scalar_lea.sflag [#allocation6], %s387
        %s389 = sand.u32 %s86, 1
        %s390 = smul.addr %s389, 48
        %s391 = scalar_lea.vmem [#allocation7], %s390
        %p392 = pneg %p99
        %p393 = pneg %p96
        %p394 = pneg %p120
        %p395 = pneg %p117
        %p396 = pneg %p141
        %p397 = pneg %p138
        %p398 = pneg %p162
        %p399 = pneg %p159
        %p400 = pneg %p183
        %p401 = pneg %p180
        %p402 = pneg %p209
        %p403 = pneg %p206
        %s404 = sand.u32 %s196, 1
        %s405 = scalar_lea.sflag [#allocation4], %s404
        %s406 = sand.u32 %s196, 1
        %s407 = smul.addr %s406, 16
        %s408 = scalar_lea.vmem [#allocation11], %s407
        %p409 = pneg %p235
        %p410 = pneg %p232
        %s411 = sand.u32 %s222, 1
        %s412 = scalar_lea.sflag [#allocation13], %s411
        %s413 = sand.u32 %s222, 1
        %s414 = smul.addr %s413, 96
        %s415 = scalar_lea.vmem [#allocation12], %s414
        %s416 = smul.u32 2, %s31
        %s417 = smul.u32 2, %s31
        %s418 = smul.u32 2, %s31
        %s419 = smul.u32 2, %s31
        %v420 = vld [vmem:[%s356] sm:$0xff]
        %v421 = vld [vmem:[%s356 + $0x8] sm:$0xff]
        %v422 = vld [vmem:[%s356 + $0x10] sm:$0xff]
        %v423 = vld [vmem:[%s356 + $0x18] sm:$0xff]
        %v424 = vld [vmem:[%s356 + $0x20] sm:$0xff]
        %v425 = vld [vmem:[%s356 + $0x28] sm:$0xff]
        %v426 = vunpack.c.l.bf16 %v420
        %v427 = vunpack.c.h.bf16 %v420
        %v428 = vunpack.c.l.bf16 %v421
        %v429 = vunpack.c.h.bf16 %v421
        %v430 = vunpack.c.l.bf16 %v422
        %v431 = vunpack.c.h.bf16 %v422
        %v432 = vunpack.c.l.bf16 %v423
        %v433 = vunpack.c.h.bf16 %v423
        %v434 = vunpack.c.l.bf16 %v424
        %v435 = vunpack.c.h.bf16 %v424
        %v436 = vunpack.c.l.bf16 %v425
        %v437 = vunpack.c.h.bf16 %v425
        %v438 = vld [vmem:[%s365] sm:$0xff]
        %v439 = vld [vmem:[%s365 + $0x8] sm:$0xff]
        %v440 = vld [vmem:[%s365 + $0x10] sm:$0xff]
        %v441 = vld [vmem:[%s365 + $0x18] sm:$0xff]
        %v442 = vld [vmem:[%s365 + $0x20] sm:$0xff]
        %v443 = vld [vmem:[%s365 + $0x28] sm:$0xff]
        %v444 = vunpack.c.l.bf16 %v438
        %v445 = vunpack.c.h.bf16 %v438
        %v446 = vunpack.c.l.bf16 %v439
        %v447 = vunpack.c.h.bf16 %v439
        %v448 = vunpack.c.l.bf16 %v440
        %v449 = vunpack.c.h.bf16 %v440
        %v450 = vunpack.c.l.bf16 %v441
        %v451 = vunpack.c.h.bf16 %v441
        %v452 = vunpack.c.l.bf16 %v442
        %v453 = vunpack.c.h.bf16 %v442
        %v454 = vunpack.c.l.bf16 %v443
        %v455 = vunpack.c.h.bf16 %v443
        %v456 = vld [vmem:[#allocation2] sm:$0x3f]
        %v458 = vlaneseq
        %v459 = vshrl.u32 %v458, 7
        %v460 = vsub.s32 0, %v459
        %v461 = vrot.slane %v456, %v460
        %v462 = vlaneseq
        %v463 = vshrl.u32 %v462, 7
        %v464 = vsub.s32 1, %v463
        %v465 = vrot.slane %v456, %v464
        %v466 = vlaneseq
        %v467 = vshrl.u32 %v466, 7
        %v468 = vsub.s32 2, %v467
        %v469 = vrot.slane %v456, %v468
        %v470 = vlaneseq
        %v471 = vshrl.u32 %v470, 7
        %v472 = vsub.s32 3, %v471
        %v473 = vrot.slane %v456, %v472
        %v474 = vlaneseq
        %v475 = vshrl.u32 %v474, 7
        %v476 = vsub.s32 4, %v475
        %v477 = vrot.slane %v456, %v476
        %v478 = vlaneseq
        %v479 = vshrl.u32 %v478, 7
        %v480 = vsub.s32 5, %v479
        %v481 = vrot.slane %v456, %v480
        %v488 = vmul.f32 %v461, %v426
        %v489 = vmul.f32 %v465, %v427
        %v490 = vmul.f32 %v469, %v428
        %v491 = vmul.f32 %v473, %v429
        %v492 = vmul.f32 %v477, %v430
        %v493 = vmul.f32 %v481, %v431
        %v494 = vmul.f32 %v461, %v432
        %v495 = vmul.f32 %v465, %v433
        %v496 = vmul.f32 %v469, %v434
        %v497 = vmul.f32 %v473, %v435
        %v498 = vmul.f32 %v477, %v436
        %v499 = vmul.f32 %v481, %v437
        %v500 = vxor.u32 %v488, 2147483648
        %v501 = vxor.u32 %v489, 2147483648
        %v502 = vxor.u32 %v490, 2147483648
        %v503 = vxor.u32 %v491, 2147483648
        %v504 = vxor.u32 %v492, 2147483648
        %v505 = vxor.u32 %v493, 2147483648
        %v506 = vxor.u32 %v494, 2147483648
        %v507 = vxor.u32 %v495, 2147483648
        %v508 = vxor.u32 %v496, 2147483648
        %v509 = vxor.u32 %v497, 2147483648
        %v510 = vxor.u32 %v498, 2147483648
        %v511 = vxor.u32 %v499, 2147483648
        %v512 = vmul.f32 %v500, 1.442695
        %v513 = vpow.pop %v512
        %v514 = vmul.f32 %v501, 1.442695
        %v515 = vpow.pop %v514
        %v516 = vmul.f32 %v502, 1.442695
        %v517 = vpow.pop %v516
        %v518 = vmul.f32 %v503, 1.442695
        %v519 = vpow.pop %v518
        %v520 = vmul.f32 %v504, 1.442695
        %v521 = vpow.pop %v520
        %v522 = vmul.f32 %v505, 1.442695
        %v523 = vpow.pop %v522
        %v524 = vmul.f32 %v506, 1.442695
        %v525 = vpow.pop %v524
        %v526 = vmul.f32 %v507, 1.442695
        %v527 = vpow.pop %v526
        %v528 = vmul.f32 %v508, 1.442695
        %v529 = vpow.pop %v528
        %v530 = vmul.f32 %v509, 1.442695
        %v531 = vpow.pop %v530
        %v532 = vmul.f32 %v510, 1.442695
        %v533 = vpow.pop %v532
        %v534 = vmul.f32 %v511, 1.442695
        %v535 = vpow.pop %v534
        %v536 = vadd.f32 %v513, 1.0
        %v537 = vadd.f32 %v515, 1.0
        %v538 = vadd.f32 %v517, 1.0
        %v539 = vadd.f32 %v519, 1.0
        %v540 = vadd.f32 %v521, 1.0
        %v541 = vadd.f32 %v523, 1.0
        %v542 = vadd.f32 %v525, 1.0
        %v543 = vadd.f32 %v527, 1.0
        %v544 = vadd.f32 %v529, 1.0
        %v545 = vadd.f32 %v531, 1.0
        %v546 = vadd.f32 %v533, 1.0
        %v547 = vadd.f32 %v535, 1.0
        %v548 = vrcp.pop %v536
        %v549 = vmul.f32 1.0, %v548
        %v550 = vrcp.pop %v537
        %v551 = vmul.f32 1.0, %v550
        %v552 = vrcp.pop %v538
        %v553 = vmul.f32 1.0, %v552
        %v554 = vrcp.pop %v539
        %v555 = vmul.f32 1.0, %v554
        %v556 = vrcp.pop %v540
        %v557 = vmul.f32 1.0, %v556
        %v558 = vrcp.pop %v541
        %v559 = vmul.f32 1.0, %v558
        %v560 = vrcp.pop %v542
        %v561 = vmul.f32 1.0, %v560
        %v562 = vrcp.pop %v543
        %v563 = vmul.f32 1.0, %v562
        %v564 = vrcp.pop %v544
        %v565 = vmul.f32 1.0, %v564
        %v566 = vrcp.pop %v545
        %v567 = vmul.f32 1.0, %v566
        %v568 = vrcp.pop %v546
        %v569 = vmul.f32 1.0, %v568
        %v570 = vrcp.pop %v547
        %v571 = vmul.f32 1.0, %v570
        %v572 = vsub.f32 %v426, %v444
        %v573 = vsub.f32 %v427, %v445
        %v574 = vsub.f32 %v428, %v446
        %v575 = vsub.f32 %v429, %v447
        %v576 = vsub.f32 %v430, %v448
        %v577 = vsub.f32 %v431, %v449
        %v578 = vsub.f32 %v432, %v450
        %v579 = vsub.f32 %v433, %v451
        %v580 = vsub.f32 %v434, %v452
        %v581 = vsub.f32 %v435, %v453
        %v582 = vsub.f32 %v436, %v454
        %v583 = vsub.f32 %v437, %v455
        %v584 = vmul.f32 %v549, %v572
        %v585 = vmul.f32 %v551, %v573
        %v586 = vmul.f32 %v553, %v574
        %v587 = vmul.f32 %v555, %v575
        %v588 = vmul.f32 %v557, %v576
        %v589 = vmul.f32 %v559, %v577
        %v590 = vmul.f32 %v561, %v578
        %v591 = vmul.f32 %v563, %v579
        %v592 = vmul.f32 %v565, %v580
        %v593 = vmul.f32 %v567, %v581
        %v594 = vmul.f32 %v569, %v582
        %v595 = vmul.f32 %v571, %v583
        %v596 = vadd.f32 %v444, %v584
        %v597 = vadd.f32 %v445, %v585
        %v598 = vadd.f32 %v446, %v586
        %v599 = vadd.f32 %v447, %v587
        %v600 = vadd.f32 %v448, %v588
        %v601 = vadd.f32 %v449, %v589
        %v602 = vadd.f32 %v450, %v590
        %v603 = vadd.f32 %v451, %v591
        %v604 = vadd.f32 %v452, %v592
        %v605 = vadd.f32 %v453, %v593
        %v606 = vadd.f32 %v454, %v594
        %v607 = vadd.f32 %v455, %v595
        %608 = vst [vmem:[%s415] sm:$0xff] %v596
        %609 = vst [vmem:[%s415 + $0x8] sm:$0xff] %v597
        %610 = vst [vmem:[%s415 + $0x10] sm:$0xff] %v598
        %611 = vst [vmem:[%s415 + $0x18] sm:$0xff] %v599
        %612 = vst [vmem:[%s415 + $0x20] sm:$0xff] %v600
        %613 = vst [vmem:[%s415 + $0x28] sm:$0xff] %v601
        %614 = vst [vmem:[%s415 + $0x30] sm:$0xff] %v602
        %615 = vst [vmem:[%s415 + $0x38] sm:$0xff] %v603
        %616 = vst [vmem:[%s415 + $0x40] sm:$0xff] %v604
        %617 = vst [vmem:[%s415 + $0x48] sm:$0xff] %v605
        %618 = vst [vmem:[%s415 + $0x50] sm:$0xff] %v606
        %619 = vst [vmem:[%s415 + $0x58] sm:$0xff] %v607
        %v620 = vld [vmem:[#allocation8] sm:$0xff]
        %v621 = vld [vmem:[#allocation8 + $0x8] sm:$0xff]
        %v622 = vld [vmem:[#allocation8 + $0x10] sm:$0xff]
        %v623 = vld [vmem:[#allocation8 + $0x18] sm:$0xff]
        %v624 = vld [vmem:[#allocation8 + $0x20] sm:$0xff]
        %v625 = vld [vmem:[#allocation8 + $0x28] sm:$0xff]
        %v626 = vld [vmem:[#allocation8 + $0x30] sm:$0xff]
        %v627 = vld [vmem:[#allocation8 + $0x38] sm:$0xff]
        %v628 = vld [vmem:[#allocation8 + $0x40] sm:$0xff]
        %v629 = vld [vmem:[#allocation8 + $0x48] sm:$0xff]
        %v630 = vld [vmem:[#allocation8 + $0x50] sm:$0xff]
        %v631 = vld [vmem:[#allocation8 + $0x58] sm:$0xff]
        %v632 = vld [vmem:[#allocation8 + $0x60] sm:$0xff]
        %v633 = vld [vmem:[#allocation8 + $0x68] sm:$0xff]
        %v634 = vld [vmem:[#allocation8 + $0x70] sm:$0xff]
        %v635 = vld [vmem:[#allocation8 + $0x78] sm:$0xff]
        %v636 = vld [vmem:[#allocation8 + $0x80] sm:$0xff]
        %v637 = vld [vmem:[#allocation8 + $0x88] sm:$0xff]
        %v638 = vld [vmem:[#allocation8 + $0x90] sm:$0xff]
        %v639 = vld [vmem:[#allocation8 + $0x98] sm:$0xff]
        %v640 = vld [vmem:[#allocation8 + $0xa0] sm:$0xff]
        %v641 = vld [vmem:[#allocation8 + $0xa8] sm:$0xff]
        %v642 = vld [vmem:[#allocation8 + $0xb0] sm:$0xff]
        %v643 = vld [vmem:[#allocation8 + $0xb8] sm:$0xff]
        %v644 = vld [vmem:[#allocation8 + $0xc0] sm:$0xff]
        %v645 = vld [vmem:[#allocation8 + $0xc8] sm:$0xff]
        %v646 = vld [vmem:[#allocation8 + $0xd0] sm:$0xff]
        %v647 = vld [vmem:[#allocation8 + $0xd8] sm:$0xff]
        %v648 = vld [vmem:[#allocation8 + $0xe0] sm:$0xff]
        %v649 = vld [vmem:[#allocation8 + $0xe8] sm:$0xff]
        %v650 = vld [vmem:[#allocation8 + $0xf0] sm:$0xff]
        %v651 = vld [vmem:[#allocation8 + $0xf8] sm:$0xff]
        %v652 = vld [vmem:[#allocation8 + $0x100] sm:$0xff]
        %v653 = vld [vmem:[#allocation8 + $0x108] sm:$0xff]
        %v654 = vld [vmem:[#allocation8 + $0x110] sm:$0xff]
        %v655 = vld [vmem:[#allocation8 + $0x118] sm:$0xff]
        %v656 = vld [vmem:[#allocation8 + $0x120] sm:$0xff]
        %v657 = vld [vmem:[#allocation8 + $0x128] sm:$0xff]
        %v658 = vld [vmem:[#allocation8 + $0x130] sm:$0xff]
        %v659 = vld [vmem:[#allocation8 + $0x138] sm:$0xff]
        %v660 = vld [vmem:[#allocation8 + $0x140] sm:$0xff]
        %v661 = vld [vmem:[#allocation8 + $0x148] sm:$0xff]
        %v662 = vld [vmem:[#allocation8 + $0x150] sm:$0xff]
        %v663 = vld [vmem:[#allocation8 + $0x158] sm:$0xff]
        %v664 = vld [vmem:[#allocation8 + $0x160] sm:$0xff]
        %v665 = vld [vmem:[#allocation8 + $0x168] sm:$0xff]
        %v666 = vld [vmem:[#allocation8 + $0x170] sm:$0xff]
        %v667 = vld [vmem:[#allocation8 + $0x178] sm:$0xff]
        %v668 = vld [vmem:[#allocation8 + $0x180] sm:$0xff]
        %v669 = vld [vmem:[#allocation8 + $0x188] sm:$0xff]
        %v670 = vld [vmem:[#allocation8 + $0x190] sm:$0xff]
        %v671 = vld [vmem:[#allocation8 + $0x198] sm:$0xff]
        %v672 = vld [vmem:[#allocation8 + $0x1a0] sm:$0xff]
        %v673 = vld [vmem:[#allocation8 + $0x1a8] sm:$0xff]
        %v674 = vld [vmem:[#allocation8 + $0x1b0] sm:$0xff]
        %v675 = vld [vmem:[#allocation8 + $0x1b8] sm:$0xff]
        %v676 = vld [vmem:[#allocation8 + $0x1c0] sm:$0xff]
        %v677 = vld [vmem:[#allocation8 + $0x1c8] sm:$0xff]
        %v678 = vld [vmem:[#allocation8 + $0x1d0] sm:$0xff]
        %v679 = vld [vmem:[#allocation8 + $0x1d8] sm:$0xff]
        %v680 = vld [vmem:[#allocation8 + $0x1e0] sm:$0xff]
        %v681 = vld [vmem:[#allocation8 + $0x1e8] sm:$0xff]
        %v682 = vld [vmem:[#allocation8 + $0x1f0] sm:$0xff]
        %v683 = vld [vmem:[#allocation8 + $0x1f8] sm:$0xff]
        %v684 = vld [vmem:[#allocation8 + $0x200] sm:$0xff]
        %v685 = vld [vmem:[#allocation8 + $0x208] sm:$0xff]
        %v686 = vld [vmem:[#allocation8 + $0x210] sm:$0xff]
        %v687 = vld [vmem:[#allocation8 + $0x218] sm:$0xff]
        %v688 = vld [vmem:[#allocation8 + $0x220] sm:$0xff]
        %v689 = vld [vmem:[#allocation8 + $0x228] sm:$0xff]
        %v690 = vld [vmem:[#allocation8 + $0x230] sm:$0xff]
        %v691 = vld [vmem:[#allocation8 + $0x238] sm:$0xff]
        %v692 = vld [vmem:[#allocation8 + $0x240] sm:$0xff]
        %v693 = vld [vmem:[#allocation8 + $0x248] sm:$0xff]
        %v694 = vld [vmem:[#allocation8 + $0x250] sm:$0xff]
        %v695 = vld [vmem:[#allocation8 + $0x258] sm:$0xff]
        %v696 = vld [vmem:[#allocation8 + $0x260] sm:$0xff]
        %v697 = vld [vmem:[#allocation8 + $0x268] sm:$0xff]
        %v698 = vld [vmem:[#allocation8 + $0x270] sm:$0xff]
        %v699 = vld [vmem:[#allocation8 + $0x278] sm:$0xff]
        %v700 = vld [vmem:[#allocation8 + $0x280] sm:$0xff]
        %v701 = vld [vmem:[#allocation8 + $0x288] sm:$0xff]
        %v702 = vld [vmem:[#allocation8 + $0x290] sm:$0xff]
        %v703 = vld [vmem:[#allocation8 + $0x298] sm:$0xff]
        %v704 = vld [vmem:[#allocation8 + $0x2a0] sm:$0xff]
        %v705 = vld [vmem:[#allocation8 + $0x2a8] sm:$0xff]
        %v706 = vld [vmem:[#allocation8 + $0x2b0] sm:$0xff]
        %v707 = vld [vmem:[#allocation8 + $0x2b8] sm:$0xff]
        %v708 = vld [vmem:[#allocation8 + $0x2c0] sm:$0xff]
        %v709 = vld [vmem:[#allocation8 + $0x2c8] sm:$0xff]
        %v710 = vld [vmem:[#allocation8 + $0x2d0] sm:$0xff]
        %v711 = vld [vmem:[#allocation8 + $0x2d8] sm:$0xff]
        %v712 = vld [vmem:[#allocation8 + $0x2e0] sm:$0xff]
        %v713 = vld [vmem:[#allocation8 + $0x2e8] sm:$0xff]
        %v714 = vld [vmem:[#allocation8 + $0x2f0] sm:$0xff]
        %v715 = vld [vmem:[#allocation8 + $0x2f8] sm:$0xff]
        %v716 = vld [vmem:[%s4] sm:$0x1]
        %v718 = vlaneseq
        %v719 = vshrl.u32 %v718, 7
        %v720 = vsub.s32 0, %v719
        %v721 = vrot.slane %v716, %v720
        %723 = vmatprep.subr.mxu0 0.0
        %724 = vmatpush1.msra.mxu0 %v620
        %725 = vmatprep.subr.mxu0 0.0
        %726 = vmatpush1.msra.mxu0 %v621
        %727 = vmatprep.subr.mxu0 0.0
        %728 = vmatpush1.msra.mxu0 %v622
        %729 = vmatprep.subr.mxu0 0.0
        %730 = vmatpush1.msra.mxu0 %v623
        %731 = vmatprep.subr.mxu0 0.0
        %732 = vmatpush1.msra.mxu0 %v624
        %733 = vmatprep.subr.mxu0 0.0
        %734 = vmatpush1.msra.mxu0 %v625
        %735 = vmatprep.subr.mxu0 0.0
        %736 = vmatpush1.msra.mxu0 %v626
        %737 = vmatprep.subr.mxu0 0.0
        %738 = vmatpush1.msra.mxu0 %v627
        %739 = vmatprep.subr.mxu0 0.0
        %740 = vmatpush1.msra.mxu0 %v628
        %741 = vmatprep.subr.mxu0 0.0
        %742 = vmatpush1.msra.mxu0 %v629
        %743 = vmatprep.subr.mxu0 0.0
        %744 = vmatpush1.msra.mxu0 %v630
        %745 = vmatprep.subr.mxu0 0.0
        %746 = vmatpush1.msra.mxu0 %v631
        %747 = vmatprep.subr.mxu0 0.0
        %748 = vmatpush1.msra.mxu0 %v632
        %749 = vmatprep.subr.mxu0 0.0
        %750 = vmatpush1.msra.mxu0 %v633
        %751 = vmatprep.subr.mxu0 0.0
        %752 = vmatpush1.msra.mxu0 %v634
        %753 = vmatprep.subr.mxu0 0.0
        %754 = vmatpush1.msra.mxu0 %v635
        %755 = vmatprep.subr.mxu0 0.0
        %756 = vmatpush1.msra.mxu0 %v636
        %757 = vmatprep.subr.mxu0 0.0
        %758 = vmatpush1.msra.mxu0 %v637
        %759 = vmatprep.subr.mxu0 0.0
        %760 = vmatpush1.msra.mxu0 %v638
        %761 = vmatprep.subr.mxu0 0.0
        %762 = vmatpush1.msra.mxu0 %v639
        %763 = vmatprep.subr.mxu0 0.0
        %764 = vmatpush1.msra.mxu0 %v640
        %765 = vmatprep.subr.mxu0 0.0
        %766 = vmatpush1.msra.mxu0 %v641
        %767 = vmatprep.subr.mxu0 0.0
        %768 = vmatpush1.msra.mxu0 %v642
        %769 = vmatprep.subr.mxu0 0.0
        %770 = vmatpush1.msra.mxu0 %v643
        %771 = vmatprep.subr.mxu0 0.0
        %772 = vmatpush1.msra.mxu0 %v644
        %773 = vmatprep.subr.mxu0 0.0
        %774 = vmatpush1.msra.mxu0 %v645
        %775 = vmatprep.subr.mxu0 0.0
        %776 = vmatpush1.msra.mxu0 %v646
        %777 = vmatprep.subr.mxu0 0.0
        %778 = vmatpush1.msra.mxu0 %v647
        %779 = vmatprep.subr.mxu0 0.0
        %780 = vmatpush1.msra.mxu0 %v648
        %781 = vmatprep.subr.mxu0 0.0
        %782 = vmatpush1.msra.mxu0 %v649
        %783 = vmatprep.subr.mxu0 0.0
        %784 = vmatpush1.msra.mxu0 %v650
        %785 = vmatprep.subr.mxu0 0.0
        %786 = vmatpush1.msra.mxu0 %v651
        %787 = vmatprep.mubr.f32.mxu0 %v597
        %788 = vmatmul.mubr.f32.gmra.mrb[0].mxu0 %v596
        %v789 = vpop.f32.mrb[0].mxu0
        %v790 = vadd.f32 %v721, %v789
        %v791 = vpop.f32.mrb[0].mxu0
        %792 = vmatprep.mubr.f32.mxu0 %v603
        %793 = vmatmul.mubr.f32.gmra.mrb[0].mxu0 %v602
        %v794 = vpop.f32.mrb[0].mxu0
        %v795 = vadd.f32 %v721, %v794
        %v796 = vpop.f32.mrb[0].mxu0
        %797 = vdwg.mxu0
        %798 = vmatprep.subr.mxu0 0.0
        %799 = vmatpush1.msra.mxu0 %v652
        %800 = vmatprep.subr.mxu0 0.0
        %801 = vmatpush1.msra.mxu0 %v653
        %802 = vmatprep.subr.mxu0 0.0
        %803 = vmatpush1.msra.mxu0 %v654
        %804 = vmatprep.subr.mxu0 0.0
        %805 = vmatpush1.msra.mxu0 %v655
        %806 = vmatprep.subr.mxu0 0.0
        %807 = vmatpush1.msra.mxu0 %v656
        %808 = vmatprep.subr.mxu0 0.0
        %809 = vmatpush1.msra.mxu0 %v657
        %810 = vmatprep.subr.mxu0 0.0
        %811 = vmatpush1.msra.mxu0 %v658
        %812 = vmatprep.subr.mxu0 0.0
        %813 = vmatpush1.msra.mxu0 %v659
        %814 = vmatprep.subr.mxu0 0.0
        %815 = vmatpush1.msra.mxu0 %v660
        %816 = vmatprep.subr.mxu0 0.0
        %817 = vmatpush1.msra.mxu0 %v661
        %818 = vmatprep.subr.mxu0 0.0
        %819 = vmatpush1.msra.mxu0 %v662
        %820 = vmatprep.subr.mxu0 0.0
        %821 = vmatpush1.msra.mxu0 %v663
        %822 = vmatprep.subr.mxu0 0.0
        %823 = vmatpush1.msra.mxu0 %v664
        %824 = vmatprep.subr.mxu0 0.0
        %825 = vmatpush1.msra.mxu0 %v665
        %826 = vmatprep.subr.mxu0 0.0
        %827 = vmatpush1.msra.mxu0 %v666
        %828 = vmatprep.subr.mxu0 0.0
        %829 = vmatpush1.msra.mxu0 %v667
        %830 = vmatprep.subr.mxu0 0.0
        %831 = vmatpush1.msra.mxu0 %v668
        %832 = vmatprep.subr.mxu0 0.0
        %833 = vmatpush1.msra.mxu0 %v669
        %834 = vmatprep.subr.mxu0 0.0
        %835 = vmatpush1.msra.mxu0 %v670
        %836 = vmatprep.subr.mxu0 0.0
        %837 = vmatpush1.msra.mxu0 %v671
        %838 = vmatprep.subr.mxu0 0.0
        %839 = vmatpush1.msra.mxu0 %v672
        %840 = vmatprep.subr.mxu0 0.0
        %841 = vmatpush1.msra.mxu0 %v673
        %842 = vmatprep.subr.mxu0 0.0
        %843 = vmatpush1.msra.mxu0 %v674
        %844 = vmatprep.subr.mxu0 0.0
        %845 = vmatpush1.msra.mxu0 %v675
        %846 = vmatprep.subr.mxu0 0.0
        %847 = vmatpush1.msra.mxu0 %v676
        %848 = vmatprep.subr.mxu0 0.0
        %849 = vmatpush1.msra.mxu0 %v677
        %850 = vmatprep.subr.mxu0 0.0
        %851 = vmatpush1.msra.mxu0 %v678
        %852 = vmatprep.subr.mxu0 0.0
        %853 = vmatpush1.msra.mxu0 %v679
        %854 = vmatprep.subr.mxu0 0.0
        %855 = vmatpush1.msra.mxu0 %v680
        %856 = vmatprep.subr.mxu0 0.0
        %857 = vmatpush1.msra.mxu0 %v681
        %858 = vmatprep.subr.mxu0 0.0
        %859 = vmatpush1.msra.mxu0 %v682
        %860 = vmatprep.subr.mxu0 0.0
        %861 = vmatpush1.msra.mxu0 %v683
        %862 = vmatprep.mubr.f32.mxu0 %v599
        %863 = vmatmul.mubr.f32.gmra.mrb[0].mxu0 %v598
        %v864 = vpop.f32.mrb[0].mxu0
        %v865 = vadd.f32 %v790, %v864
        %v866 = vpop.f32.mrb[0].mxu0
        %867 = vmatprep.mubr.f32.mxu0 %v605
        %868 = vmatmul.mubr.f32.gmra.mrb[0].mxu0 %v604
        %v869 = vpop.f32.mrb[0].mxu0
        %v870 = vadd.f32 %v795, %v869
        %v871 = vpop.f32.mrb[0].mxu0
        %872 = vdwg.mxu0
        %873 = vmatprep.subr.mxu0 0.0
        %874 = vmatpush1.msra.mxu0 %v684
        %875 = vmatprep.subr.mxu0 0.0
        %876 = vmatpush1.msra.mxu0 %v685
        %877 = vmatprep.subr.mxu0 0.0
        %878 = vmatpush1.msra.mxu0 %v686
        %879 = vmatprep.subr.mxu0 0.0
        %880 = vmatpush1.msra.mxu0 %v687
        %881 = vmatprep.subr.mxu0 0.0
        %882 = vmatpush1.msra.mxu0 %v688
        %883 = vmatprep.subr.mxu0 0.0
        %884 = vmatpush1.msra.mxu0 %v689
        %885 = vmatprep.subr.mxu0 0.0
        %886 = vmatpush1.msra.mxu0 %v690
        %887 = vmatprep.subr.mxu0 0.0
        %888 = vmatpush1.msra.mxu0 %v691
        %889 = vmatprep.subr.mxu0 0.0
        %890 = vmatpush1.msra.mxu0 %v692
        %891 = vmatprep.subr.mxu0 0.0
        %892 = vmatpush1.msra.mxu0 %v693
        %893 = vmatprep.subr.mxu0 0.0
        %894 = vmatpush1.msra.mxu0 %v694
        %895 = vmatprep.subr.mxu0 0.0
        %896 = vmatpush1.msra.mxu0 %v695
        %897 = vmatprep.subr.mxu0 0.0
        %898 = vmatpush1.msra.mxu0 %v696
        %899 = vmatprep.subr.mxu0 0.0
        %900 = vmatpush1.msra.mxu0 %v697
        %901 = vmatprep.subr.mxu0 0.0
        %902 = vmatpush1.msra.mxu0 %v698
        %903 = vmatprep.subr.mxu0 0.0
        %904 = vmatpush1.msra.mxu0 %v699
        %905 = vmatprep.subr.mxu0 0.0
        %906 = vmatpush1.msra.mxu0 %v700
        %907 = vmatprep.subr.mxu0 0.0
        %908 = vmatpush1.msra.mxu0 %v701
        %909 = vmatprep.subr.mxu0 0.0
        %910 = vmatpush1.msra.mxu0 %v702
        %911 = vmatprep.subr.mxu0 0.0
        %912 = vmatpush1.msra.mxu0 %v703
        %913 = vmatprep.subr.mxu0 0.0
        %914 = vmatpush1.msra.mxu0 %v704
        %915 = vmatprep.subr.mxu0 0.0
        %916 = vmatpush1.msra.mxu0 %v705
        %917 = vmatprep.subr.mxu0 0.0
        %918 = vmatpush1.msra.mxu0 %v706
        %919 = vmatprep.subr.mxu0 0.0
        %920 = vmatpush1.msra.mxu0 %v707
        %921 = vmatprep.subr.mxu0 0.0
        %922 = vmatpush1.msra.mxu0 %v708
        %923 = vmatprep.subr.mxu0 0.0
        %924 = vmatpush1.msra.mxu0 %v709
        %925 = vmatprep.subr.mxu0 0.0
        %926 = vmatpush1.msra.mxu0 %v710
        %927 = vmatprep.subr.mxu0 0.0
        %928 = vmatpush1.msra.mxu0 %v711
        %929 = vmatprep.subr.mxu0 0.0
        %930 = vmatpush1.msra.mxu0 %v712
        %931 = vmatprep.subr.mxu0 0.0
        %932 = vmatpush1.msra.mxu0 %v713
        %933 = vmatprep.subr.mxu0 0.0
        %934 = vmatpush1.msra.mxu0 %v714
        %935 = vmatprep.subr.mxu0 0.0
        %936 = vmatpush1.msra.mxu0 %v715
        %937 = vmatprep.mubr.f32.mxu0 %v601
        %938 = vmatmul.mubr.f32.gmra.mrb[0].mxu0 %v600
        %v939 = vpop.f32.mrb[0].mxu0
        %v940 = vadd.f32 %v865, %v939
        %v941 = vpop.f32.mrb[0].mxu0
        %942 = vmatprep.mubr.f32.mxu0 %v607
        %943 = vmatmul.mubr.f32.gmra.mrb[0].mxu0 %v606
        %v944 = vpop.f32.mrb[0].mxu0
        %v945 = vadd.f32 %v870, %v944
        %v946 = vpop.f32.mrb[0].mxu0
        %947 = vdwg.mxu0
        %v948 = vmax.f32 %v940, 0.0
        %v949 = vmax.f32 %v945, 0.0
        %v950 = vld [vmem:[#allocation10] sm:$0xff]
        %v951 = vld [vmem:[#allocation10 + $0x8] sm:$0xff]
        %v952 = vld [vmem:[#allocation10 + $0x10] sm:$0xff]
        %v953 = vld [vmem:[#allocation10 + $0x18] sm:$0xff]
        %v954 = vld [vmem:[#allocation10 + $0x20] sm:$0xff]
        %v955 = vld [vmem:[#allocation10 + $0x28] sm:$0xff]
        %v956 = vld [vmem:[#allocation10 + $0x30] sm:$0xff]
        %v957 = vld [vmem:[#allocation10 + $0x38] sm:$0xff]
        %v958 = vld [vmem:[#allocation10 + $0x40] sm:$0xff]
        %v959 = vld [vmem:[#allocation10 + $0x48] sm:$0xff]
        %v960 = vld [vmem:[#allocation10 + $0x50] sm:$0xff]
        %v961 = vld [vmem:[#allocation10 + $0x58] sm:$0xff]
        %v962 = vld [vmem:[#allocation10 + $0x60] sm:$0xff]
        %v963 = vld [vmem:[#allocation10 + $0x68] sm:$0xff]
        %v964 = vld [vmem:[#allocation10 + $0x70] sm:$0xff]
        %v965 = vld [vmem:[#allocation10 + $0x78] sm:$0xff]
        %v966 = vld [vmem:[%s6] sm:$0x1]
        %v968 = vlaneseq
        %v969 = vshrl.u32 %v968, 7
        %v970 = vsub.s32 0, %v969
        %v971 = vrot.slane %v966, %v970
        %973 = vmatprep.subr.mxu0 0.0
        %974 = vmatpush1.msra.mxu0 %v950
        %975 = vmatprep.subr.mxu0 0.0
        %976 = vmatpush1.msra.mxu0 %v951
        %977 = vmatprep.subr.mxu0 0.0
        %978 = vmatpush1.msra.mxu0 %v952
        %979 = vmatprep.subr.mxu0 0.0
        %980 = vmatpush1.msra.mxu0 %v953
        %981 = vmatprep.subr.mxu0 0.0
        %982 = vmatpush1.msra.mxu0 %v954
        %983 = vmatprep.subr.mxu0 0.0
        %984 = vmatpush1.msra.mxu0 %v955
        %985 = vmatprep.subr.mxu0 0.0
        %986 = vmatpush1.msra.mxu0 %v956
        %987 = vmatprep.subr.mxu0 0.0
        %988 = vmatpush1.msra.mxu0 %v957
        %989 = vmatprep.subr.mxu0 0.0
        %990 = vmatpush1.msra.mxu0 %v958
        %991 = vmatprep.subr.mxu0 0.0
        %992 = vmatpush1.msra.mxu0 %v959
        %993 = vmatprep.subr.mxu0 0.0
        %994 = vmatpush1.msra.mxu0 %v960
        %995 = vmatprep.subr.mxu0 0.0
        %996 = vmatpush1.msra.mxu0 %v961
        %997 = vmatprep.subr.mxu0 0.0
        %998 = vmatpush1.msra.mxu0 %v962
        %999 = vmatprep.subr.mxu0 0.0
        %1000 = vmatpush1.msra.mxu0 %v963
        %1001 = vmatprep.subr.mxu0 0.0
        %1002 = vmatpush1.msra.mxu0 %v964
        %1003 = vmatprep.subr.mxu0 0.0
        %1004 = vmatpush1.msra.mxu0 %v965
        %1005 = vmatprep.subr.mxu0 0.0
        %1006 = vmatpush1.msra.mxu0 0.0
        %1007 = vmatprep.subr.mxu0 0.0
        %1008 = vmatpush1.msra.mxu0 0.0
        %1009 = vmatprep.subr.mxu0 0.0
        %1010 = vmatpush1.msra.mxu0 0.0
        %1011 = vmatprep.subr.mxu0 0.0
        %1012 = vmatpush1.msra.mxu0 0.0
        %1013 = vmatprep.subr.mxu0 0.0
        %1014 = vmatpush1.msra.mxu0 0.0
        %1015 = vmatprep.subr.mxu0 0.0
        %1016 = vmatpush1.msra.mxu0 0.0
        %1017 = vmatprep.subr.mxu0 0.0
        %1018 = vmatpush1.msra.mxu0 0.0
        %1019 = vmatprep.subr.mxu0 0.0
        %1020 = vmatpush1.msra.mxu0 0.0
        %1021 = vmatprep.subr.mxu0 0.0
        %1022 = vmatpush1.msra.mxu0 0.0
        %1023 = vmatprep.subr.mxu0 0.0
        %1024 = vmatpush1.msra.mxu0 0.0
        %1025 = vmatprep.subr.mxu0 0.0
        %1026 = vmatpush1.msra.mxu0 0.0
        %1027 = vmatprep.subr.mxu0 0.0
        %1028 = vmatpush1.msra.mxu0 0.0
        %1029 = vmatprep.subr.mxu0 0.0
        %1030 = vmatpush1.msra.mxu0 0.0
        %1031 = vmatprep.subr.mxu0 0.0
        %1032 = vmatpush1.msra.mxu0 0.0
        %1033 = vmatprep.subr.mxu0 0.0
        %1034 = vmatpush1.msra.mxu0 0.0
        %1035 = vmatprep.subr.mxu0 0.0
        %1036 = vmatpush1.msra.mxu0 0.0
        %1037 = vmatprep.mubr.f32.mxu0 0.0
        %1038 = vmatmul.mubr.f32.gmra.mrb[0].mxu0 %v948
        %v1039 = vpop.f32.mrb[0].mxu0
        %v1040 = vadd.f32 %v971, %v1039
        %v1041 = vpop.f32.mrb[0].mxu0
        %1042 = vmatprep.mubr.f32.mxu0 0.0
        %1043 = vmatmul.mubr.f32.gmra.mrb[0].mxu0 %v949
        %v1044 = vpop.f32.mrb[0].mxu0
        %v1045 = vadd.f32 %v971, %v1044
        %v1046 = vpop.f32.mrb[0].mxu0
        %1047 = vdwg.mxu0
        %1048 = vst [vmem:[%s408] sm:$0xff] %v1040
        %1049 = vst [vmem:[%s408 + $0x8] sm:$0xff] %v1045
        %s1050 = sand.u32 %s196, 1
        %s1051 = scalar_lea.sflag [#allocation4], %s1050
        %s1052 = sand.u32 %s196, 1
        %s1053 = smul.addr %s1052, 16
        %s1054 = scalar_lea.vmem [#allocation11], %s1053
        %s1055 = sand.u32 %s222, 1
        %s1056 = scalar_lea.sflag [#allocation13], %s1055
        %s1057 = sand.u32 %s222, 1
        %s1058 = smul.addr %s1057, 96
        %s1059 = scalar_lea.vmem [#allocation12], %s1058
        // Predicated region
        $region69: #{tpu_custom_call.1} parent=47 // pred_check
          %p1060 = pneg %p206
        $region70: #{tpu_custom_call.1} parent=47 // pred_check_branch
          %1062 = sbr.rel (%p1060) target = $region72
        $region71: #{tpu_custom_call.1} parent=47 // pred_region
          %s1063 = smul.u32 2, %s31
          %s1065 = ssub.s32 256, 256
          %1066 = vsyncadd %s1051, %s1065
          %s1067 = smul.addr %s1063, 128
          %s1068 = scalar_lea.hbm %s7, %s1067
          %s1069 = sshll.u32 %s1054, 4
          %s1070 = int_to_ptr.vmem [resolvable:$true] %s1069
          %1075 = dma.vmem_to_hbm [thread:$0]  %s1070, 256, %s1068, %s1051, 128, 128, 8
        $region72: #{tpu_custom_call.1} parent=47 // pred_fallthru
          _
        // Predicated region
        $region73: #{tpu_custom_call.1} parent=47 // pred_check
          %p1076 = pneg %p232
        $region74: #{tpu_custom_call.1} parent=47 // pred_check_branch
          %1078 = sbr.rel (%p1076) target = $region76
        $region75: #{tpu_custom_call.1} parent=47 // pred_region
          %s1079 = smul.u32 2, %s31
          %s1081 = ssub.s32 1536, 1536
          %1082 = vsyncadd %s1056, %s1081
          %s1083 = smul.addr %s1079, 6
          %s1084 = smul.addr %s1083, 128
          %s1085 = scalar_lea.hbm %s8, %s1084
          %s1086 = sshll.u32 %s1059, 4
          %s1087 = int_to_ptr.vmem [resolvable:$true] %s1086
          %1092 = dma.vmem_to_hbm [thread:$0]  %s1087, 1536, %s1085, %s1056, 768, 768, 48
        $region76: #{tpu_custom_call.1} parent=47 // pred_fallthru
          _
      $region48: #{tpu_custom_call.1} parent=5 // pred_fallthru
        _
      %p1093 = scmp.le.s32.totalorder 2, %s26
      // Predicated region
      $region77: #{tpu_custom_call.1} parent=5 // pred_check
        %p1094 = pneg %p1093
      $region78: #{tpu_custom_call.1} parent=5 // pred_check_branch
        %1096 = sbr.rel (%p1094) target = $region80
      $region79: #{tpu_custom_call.1} parent=5 // pred_region
        %s1097 = ssub.s32 %s26, 2
        // Predicated region
        $region81: #{tpu_custom_call.1} parent=79 // pred_check
          %p1098 = pneg %p212
        $region82: #{tpu_custom_call.1} parent=79 // pred_check_branch
          %1100 = sbr.rel (%p1098) target = $region84
        $region83: #{tpu_custom_call.1} parent=79 // pred_region
          %s1101 = sand.u32 %s197, 1
          %s1102 = scalar_lea.sflag [#allocation4], %s1101
          %s1103 = sand.u32 %s197, 1
          %s1104 = smul.addr %s1103, 16
          %s1105 = scalar_lea.vmem [#allocation11], %s1104
          %1106 = dma.done %s1102, 256
        $region84: #{tpu_custom_call.1} parent=79 // pred_fallthru
          _
        // Predicated region
        $region85: #{tpu_custom_call.1} parent=79 // pred_check
          %p1107 = pneg %p238
        $region86: #{tpu_custom_call.1} parent=79 // pred_check_branch
          %1109 = sbr.rel (%p1107) target = $region88
        $region87: #{tpu_custom_call.1} parent=79 // pred_region
          %s1110 = sand.u32 %s223, 1
          %s1111 = scalar_lea.sflag [#allocation13], %s1110
          %s1112 = sand.u32 %s223, 1
          %s1113 = smul.addr %s1112, 96
          %s1114 = scalar_lea.vmem [#allocation12], %s1113
          %1115 = dma.done %s1111, 1536
        $region88: #{tpu_custom_call.1} parent=79 // pred_fallthru
          _
      $region80: #{tpu_custom_call.1} parent=5 // pred_fallthru
        _
    $region6: #{tpu_custom_call.1} parent=1 // loop_footer
      %s30 = sadd.s32 1, %s26
    $region7: #{tpu_custom_call.1} parent=1 // loop_footer_branch
      %25 = sbr.rel target = $region3
    $region8: #{tpu_custom_call.1} parent=1 // loop_exit
      _
    %1116 = vsyncpa [#allocation3], 1
    %s1117 = scalar_lea.sflag [#allocation3], 1
    %1118 = vsyncpa %s1117, 1
    %1119 = vsyncpa [#allocation6], 1
    %s1120 = scalar_lea.sflag [#allocation6], 1
    %1121 = vsyncpa %s1120, 1
    %1122 = vsyncpa [#allocation9], 1
    %1123 = vsyncpa [#allocation4], 1
    %s1124 = scalar_lea.sflag [#allocation4], 1
    %1125 = vsyncpa %s1124, 1
    %1126 = vsyncpa [#allocation13], 1
    %s1127 = scalar_lea.sflag [#allocation13], 1
    %1128 = vsyncpa %s1127, 1

</llo_original>
